<compile_context>
chip_gen: v6e
topology: v6e:2x2x1
jax: 0.10.0
libtpu: 0.0.40
codegen_flags: <defaults>
</compile_context>

<pallas_src>
import functools

import numpy as np
import jax
import jax.numpy as jnp
from jax.experimental import pallas as pl
from jax.experimental.pallas import tpu as pltpu

EPS = 1e-5


# ----------------------------------------------------------------------------
# Pallas kernel: one Encoder_Layer per grid step, activation carried in VMEM
# ----------------------------------------------------------------------------
def encoder_layer_kernel(x_ref, wqkv_ref, wc_ref, bc_ref, g1_ref, be1_ref,
                         w1_ref, b1_ref, w2_ref, b2_ref, g2_ref, be2_ref,
                         o_ref, act_ref, heads_ref, *, head_num, key_dim):
    B, P, E = x_ref.shape
    H, K = head_num, key_dim
    HK = H * K
    BP = B * P
    inv_bp = 1.0 / float(BP)
    bf16 = jnp.bfloat16
    l = pl.program_id(0)

    # Layer 0: seed the carried activation from the kernel input.
    @pl.when(l == 0)
    def _():
        act_ref[...] = x_ref[...].reshape(BP, E)

    x2 = act_ref[...]                                    # (BP, E) f32

    # ---- fused QKV projection; 1/sqrt(K) pre-folded into the Wq columns ----
    qkv = jnp.dot(x2.astype(bf16), wqkv_ref[...],
                  preferred_element_type=jnp.float32)    # (BP, 3HK) f32
    qkv = qkv.reshape(B, P, 3 * HK)

    # ---- multi-head attention; head outputs staged in VMEM scratch ----
    for h in range(H):                                   # H static -> unrolled
        q_h = qkv[:, :, h * K:(h + 1) * K].astype(bf16)
        k_h = qkv[:, :, HK + h * K:HK + (h + 1) * K].astype(bf16)
        v_h = qkv[:, :, 2 * HK + h * K:2 * HK + (h + 1) * K].astype(bf16)
        s = jnp.einsum('bpk,bqk->bpq', q_h, k_h,
                       preferred_element_type=jnp.float32)      # f32 scores
        s = s - jnp.max(s, axis=-1, keepdims=True)               # stable softmax
        w = jnp.exp(s)
        w = w * pl.reciprocal(jnp.sum(w, axis=-1, keepdims=True),
                              approx=True)                       # EUP divide
        pv = jnp.einsum('bpq,bqk->bpk', w.astype(bf16), v_h,
                        preferred_element_type=jnp.float32)
        heads_ref[:, h * K:(h + 1) * K] = pv.reshape(BP, K).astype(bf16)

    # ---- single head-combine matmul (no lane concat) ----
    mh = jnp.dot(heads_ref[...], wc_ref[...],
                 preferred_element_type=jnp.float32) + bc_ref[...]

    # ---- Add & BatchNorm1d #1 (training-mode stats, one-pass sums) ----
    a1 = x2 + mh
    m1 = jnp.sum(a1, axis=0, keepdims=True) * inv_bp
    v1 = jnp.maximum(jnp.sum(a1 * a1, axis=0, keepdims=True) * inv_bp
                     - m1 * m1, 0.0)
    out1 = (a1 - m1) * jax.lax.rsqrt(v1 + EPS) * g1_ref[...] + be1_ref[...]

    # ---- feed forward: W2(relu(W1(x))) ----
    h1 = jnp.dot(out1.astype(bf16), w1_ref[...],
                 preferred_element_type=jnp.float32) + b1_ref[...]
    h1 = jnp.maximum(h1, 0.0)
    ff = jnp.dot(h1.astype(bf16), w2_ref[...],
                 preferred_element_type=jnp.float32) + b2_ref[...]

    # ---- Add & BatchNorm1d #2 ----
    a2 = out1 + ff
    m2 = jnp.sum(a2, axis=0, keepdims=True) * inv_bp
    v2 = jnp.maximum(jnp.sum(a2 * a2, axis=0, keepdims=True) * inv_bp
                     - m2 * m2, 0.0)
    x_new = (a2 - m2) * jax.lax.rsqrt(v2 + EPS) * g2_ref[...] + be2_ref[...]

    act_ref[...] = x_new                                 # carry to next layer

    @pl.when(l == pl.num_programs(0) - 1)
    def _():
        o_ref[...] = x_new.reshape(B, P, E).astype(o_ref.dtype)


def encoder_layers_pallas(x, params, head_num, key_dim):
    bf16 = jnp.bfloat16
    B, P, E = x.shape
    HK = head_num * key_dim
    L = params['Wqkv'].shape[0]

    # Fold the 1/sqrt(key_dim) score scaling into the Wq columns of the fused
    # QKV weight (one-time weight prep; removes the in-kernel multiply).
    scale = jnp.concatenate(
        [jnp.full((HK,), 1.0 / float(np.sqrt(key_dim)), jnp.float32),
         jnp.ones((2 * HK,), jnp.float32)])
    wqkv = (params['Wqkv'] * scale).astype(bf16)

    args = (x, wqkv,
            params['Wc'].astype(bf16), params['bc'],
            params['g1'], params['be1'],
            params['W1'].astype(bf16), params['b1'],
            params['W2'].astype(bf16), params['b2'],
            params['g2'], params['be2'])

    def per_layer_spec(arr):
        d1, d2 = arr.shape[1], arr.shape[2]
        return pl.BlockSpec((None, d1, d2), lambda l: (l, 0, 0))

    in_specs = [pl.BlockSpec((B, P, E), lambda l: (0, 0, 0))]   # resident input
    in_specs += [per_layer_spec(a) for a in args[1:]]

    kernel = functools.partial(encoder_layer_kernel,
                               head_num=head_num, key_dim=key_dim)
    return pl.pallas_call(
        kernel,
        out_shape=jax.ShapeDtypeStruct(x.shape, x.dtype),
        grid_spec=pltpu.PrefetchScalarGridSpec(
            num_scalar_prefetch=0,
            grid=(L,),
            in_specs=in_specs,
            out_specs=pl.BlockSpec((B, P, E), lambda l: (0, 0, 0)),
            scratch_shapes=[pltpu.VMEM((B * P, E), jnp.float32),   # activation
                            pltpu.VMEM((B * P, HK), bf16)]),       # head slab
        compiler_params=pltpu.CompilerParams(
            dimension_semantics=("arbitrary",)),
    )(*args)


# ----------------------------------------------------------------------------
# Deterministic synthetic parameters (PyTorch-like uniform fan-in init),
# stacked with a leading L dimension.  Matmul weights are snapped to
# bf16-representable values so in-kernel bf16 casts are (nearly) exact.
# ----------------------------------------------------------------------------
def init_params(key, E, L, H, K, F):
    def linear(k, fin, fout, bias=True):
        kw, kb = jax.random.split(k)
        bound = 1.0 / float(np.sqrt(fin))
        w = jax.random.uniform(kw, (fin, fout), jnp.float32, -bound, bound)
        w = w.astype(jnp.bfloat16).astype(jnp.float32)
        b = jax.random.uniform(kb, (1, fout), jnp.float32, -bound, bound)
        return (w, b) if bias else (w, None)

    HK = H * K
    per = {n: [] for n in ('Wqkv', 'Wc', 'bc', 'W1', 'b1', 'W2', 'b2',
                           'g1', 'be1', 'g2', 'be2')}
    for lk in jax.random.split(key, L):
        k0, k1, k2, k3, k4, k5 = jax.random.split(lk, 6)
        wq, _ = linear(k0, E, HK, bias=False)
        wk, _ = linear(k1, E, HK, bias=False)
        wv, _ = linear(k2, E, HK, bias=False)
        wc, bc = linear(k3, HK, E)
        w1, b1 = linear(k4, E, F)
        w2, b2 = linear(k5, F, E)
        per['Wqkv'].append(jnp.concatenate([wq, wk, wv], axis=1))
        per['Wc'].append(wc); per['bc'].append(bc)
        per['W1'].append(w1); per['b1'].append(b1)
        per['W2'].append(w2); per['b2'].append(b2)
        per['g1'].append(jnp.ones((1, E), jnp.float32))
        per['be1'].append(jnp.zeros((1, E), jnp.float32))
        per['g2'].append(jnp.ones((1, E), jnp.float32))
        per['be2'].append(jnp.zeros((1, E), jnp.float32))
    return {n: jnp.stack(v, axis=0) for n, v in per.items()}


# ----------------------------------------------------------------------------
# Pure-numpy float64 reference (mirrors the PyTorch Encoder_Layer exactly)
# ----------------------------------------------------------------------------
def _np(a):
    return np.asarray(a, dtype=np.float64)


def encoder_layers_ref(x, params, H, K):
    x = _np(x)
    B, P, E = x.shape
    HK = H * K
    L = params['Wqkv'].shape[0]
    for l in range(L):
        Wqkv = _np(params['Wqkv'][l]); Wc = _np(params['Wc'][l])
        bc = _np(params['bc'][l])
        W1 = _np(params['W1'][l]); b1 = _np(params['b1'][l])
        W2 = _np(params['W2'][l]); b2 = _np(params['b2'][l])
        g1 = _np(params['g1'][l]); be1 = _np(params['be1'][l])
        g2 = _np(params['g2'][l]); be2 = _np(params['be2'][l])

        q = x @ Wqkv[:, :HK]
        k = x @ Wqkv[:, HK:2 * HK]
        v = x @ Wqkv[:, 2 * HK:]

        def heads(t):
            return t.reshape(B, P, H, K).transpose(0, 2, 1, 3)   # (B,H,P,K)

        qh, kh, vh = heads(q), heads(k), heads(v)
        s = np.einsum('bhpk,bhqk->bhpq', qh, kh) / np.sqrt(K)
        s = s - s.max(-1, keepdims=True)
        w = np.exp(s)
        w = w / w.sum(-1, keepdims=True)
        o = np.einsum('bhpq,bhqk->bhpk', w, vh).transpose(0, 2, 1, 3)
        mh = o.reshape(B, P, HK) @ Wc + bc

        def bn(a, g, b):
            a2 = a.reshape(B * P, E)
            m = a2.mean(0)
            var = ((a2 - m) ** 2).mean(0)
            return (((a2 - m) / np.sqrt(var + EPS)) * g + b).reshape(B, P, E)

        out1 = bn(x + mh, g1, be1)
        ff = np.maximum(out1 @ W1 + b1, 0.0) @ W2 + b2
        x = bn(out1 + ff, g2, be2)
    return x


# ----------------------------------------------------------------------------
if __name__ == "__main__":
    B = 2            # batch
    P = 8            # problem size (sequence length)
    E = 32           # embedding_dim
    H = 4            # head_num
    K = 8            # key_dim   (H * K == E)
    F = 64           # ff_hidden_dim
    L = 2            # number of stacked Encoder_Layers (grid axis)

    key = jax.random.PRNGKey(0)
    kx, kp = jax.random.split(key)
    x = jax.random.normal(kx, (B, P, E), jnp.float32)
    params = init_params(kp, E, L, H, K, F)

    out = encoder_layers_pallas(x, params, H, K)
    out = jax.block_until_ready(out)
    assert out.shape == (B, P, E) and out.dtype == jnp.float32

    ref = encoder_layers_ref(x, params, H, K)
    np.testing.assert_allclose(np.asarray(out, np.float64), ref,
                               rtol=5e-2, atol=5e-2)
    print("KERNEL_OK")
</pallas_src>

<mosaic_0001>
module attributes {stable_mosaic.version = 11 : i64} {
  func.func @encoder_layer_kernel(%arg0: i32, %arg1: memref<2x8x32xf32, #tpu.memory_space<vmem>>, %arg2: memref<1x32x96xbf16, #tpu.memory_space<vmem>>, %arg3: memref<1x32x32xbf16, #tpu.memory_space<vmem>>, %arg4: memref<1x1x32xf32, #tpu.memory_space<vmem>>, %arg5: memref<1x1x32xf32, #tpu.memory_space<vmem>>, %arg6: memref<1x1x32xf32, #tpu.memory_space<vmem>>, %arg7: memref<1x32x64xbf16, #tpu.memory_space<vmem>>, %arg8: memref<1x1x64xf32, #tpu.memory_space<vmem>>, %arg9: memref<1x64x32xbf16, #tpu.memory_space<vmem>>, %arg10: memref<1x1x32xf32, #tpu.memory_space<vmem>>, %arg11: memref<1x1x32xf32, #tpu.memory_space<vmem>>, %arg12: memref<1x1x32xf32, #tpu.memory_space<vmem>>, %arg13: memref<2x8x32xf32, #tpu.memory_space<vmem>>, %arg14: memref<16x32xf32, #tpu.memory_space<vmem>>, %arg15: memref<16x32xbf16, #tpu.memory_space<vmem>>) attributes {dimension_semantics = [#tpu.dimension_semantics<arbitrary>], iteration_bounds = array<i64: 2>, scalar_prefetch = 0 : i64, scratch_operands = 2 : i64, tpu.core_type = #tpu.core_type<tc>, window_params = [{pipeline_mode = #tpu.pipeline_mode<synchronous>, transform_indices = @transform_0, window_bounds = array<i64: 2, 8, 32>}, {transform_indices = @transform_1, window_bounds = array<i64: 1, 32, 96>}, {transform_indices = @transform_2, window_bounds = array<i64: 1, 32, 32>}, {transform_indices = @transform_3, window_bounds = array<i64: 1, 1, 32>}, {transform_indices = @transform_4, window_bounds = array<i64: 1, 1, 32>}, {transform_indices = @transform_5, window_bounds = array<i64: 1, 1, 32>}, {transform_indices = @transform_6, window_bounds = array<i64: 1, 32, 64>}, {transform_indices = @transform_7, window_bounds = array<i64: 1, 1, 64>}, {transform_indices = @transform_8, window_bounds = array<i64: 1, 64, 32>}, {transform_indices = @transform_9, window_bounds = array<i64: 1, 1, 32>}, {transform_indices = @transform_10, window_bounds = array<i64: 1, 1, 32>}, {transform_indices = @transform_11, window_bounds = array<i64: 1, 1, 32>}, {pipeline_mode = #tpu.pipeline_mode<synchronous>, transform_indices = @transform_12, window_bounds = array<i64: 2, 8, 32>}]} {
    %c0_i32 = arith.constant 0 : i32
    %0 = arith.cmpi eq, %arg0, %c0_i32 : i32
    %1 = arith.extui %0 : i1 to i32
    %c0_i32_0 = arith.constant 0 : i32
    %2 = arith.cmpi ne, %1, %c0_i32_0 : i32
    scf.if %2 {
      %c0_77 = arith.constant 0 : index
      %c0_78 = arith.constant 0 : index
      %c0_79 = arith.constant 0 : index
      %185 = vector.load %arg1[%c0_77, %c0_78, %c0_79] : memref<2x8x32xf32, #tpu.memory_space<vmem>>, vector<2x8x32xf32>
      %186 = vector.shape_cast %185 : vector<2x8x32xf32> to vector<16x32xf32>
      %c0_80 = arith.constant 0 : index
      %c0_81 = arith.constant 0 : index
      %187 = vector.load %arg14[%c0_80, %c0_81] : memref<16x32xf32, #tpu.memory_space<vmem>>, vector<16x32xf32>
      tpu.vector_store %arg14[%c0_80, %c0_81], %186 {strides = array<i32>} : memref<16x32xf32, #tpu.memory_space<vmem>>, vector<16x32xf32>,
    } else {
    }
    %c0 = arith.constant 0 : index
    %c0_1 = arith.constant 0 : index
    %3 = vector.load %arg14[%c0, %c0_1] : memref<16x32xf32, #tpu.memory_space<vmem>>, vector<16x32xf32>
    %4 = arith.truncf %3 : vector<16x32xf32> to vector<16x32xbf16>
    %c0_2 = arith.constant 0 : index
    %c0_3 = arith.constant 0 : index
    %c0_4 = arith.constant 0 : index
    %5 = vector.load %arg2[%c0_2, %c0_3, %c0_4] : memref<1x32x96xbf16, #tpu.memory_space<vmem>>, vector<1x32x96xbf16>
    %6 = vector.shape_cast %5 : vector<1x32x96xbf16> to vector<32x96xbf16>
    %cst = arith.constant dense<0.000000e+00> : vector<16x96xf32>
    %7 = tpu.matmul %4, %6, %cst {dimension_numbers = #tpu.dot_dimension_numbers<[1], [0], [0], [1], [0, 0, 1, 1], [], []>} : vector<16x32xbf16>, vector<32x96xbf16>, vector<16x96xf32> -> vector<16x96xf32>
    %8 = vector.shape_cast %7 : vector<16x96xf32> to vector<2x8x96xf32>
    %9 = vector.extract_strided_slice %8 {offsets = [0, 0, 0], sizes = [2, 8, 8], strides = [1, 1, 1]} : vector<2x8x96xf32> to vector<2x8x8xf32>
    %10 = arith.truncf %9 : vector<2x8x8xf32> to vector<2x8x8xbf16>
    %11 = vector.extract_strided_slice %8 {offsets = [0, 0, 32], sizes = [2, 8, 8], strides = [1, 1, 1]} : vector<2x8x96xf32> to vector<2x8x8xf32>
    %12 = arith.truncf %11 : vector<2x8x8xf32> to vector<2x8x8xbf16>
    %13 = vector.extract_strided_slice %8 {offsets = [0, 0, 64], sizes = [2, 8, 8], strides = [1, 1, 1]} : vector<2x8x96xf32> to vector<2x8x8xf32>
    %14 = arith.truncf %13 : vector<2x8x8xf32> to vector<2x8x8xbf16>
    "tpu.trace_start"() <{level = 10 : i32, message = "bpk,bqk->bpq"}> : () -> ()
    %cst_5 = arith.constant dense<0.000000e+00> : vector<2x8x8xf32>
    %15 = tpu.matmul %10, %12, %cst_5 {dimension_numbers = #tpu.dot_dimension_numbers<[2], [2], [1], [1], [0, 0, 0, 1, 1, 1], [0], [0]>} : vector<2x8x8xbf16>, vector<2x8x8xbf16>, vector<2x8x8xf32> -> vector<2x8x8xf32>
    "tpu.trace_stop"() : () -> ()
    %cst_6 = arith.constant dense<0xFF800000> : vector<2x8xf32>
    %16 = vector.multi_reduction <maximumf>, %15, %cst_6 [2] : vector<2x8x8xf32> to vector<2x8xf32>
    %17 = vector.shape_cast %16 : vector<2x8xf32> to vector<2x8x1xf32>
    %18 = vector.broadcast %17 : vector<2x8x1xf32> to vector<2x8x8xf32>
    %19 = arith.subf %15, %18 : vector<2x8x8xf32>
    %20 = math.exp %19 : vector<2x8x8xf32>
    %cst_7 = arith.constant dense<0.000000e+00> : vector<2x8xf32>
    %21 = vector.multi_reduction <add>, %20, %cst_7 [2] : vector<2x8x8xf32> to vector<2x8xf32>
    %22 = vector.shape_cast %21 : vector<2x8xf32> to vector<2x8x1xf32>
    %23 = tpu.reciprocal %22 {approx = true} : vector<2x8x1xf32> -> vector<2x8x1xf32>
    %24 = vector.broadcast %23 : vector<2x8x1xf32> to vector<2x8x8xf32>
    %25 = arith.mulf %20, %24 : vector<2x8x8xf32>
    %26 = arith.truncf %25 : vector<2x8x8xf32> to vector<2x8x8xbf16>
    "tpu.trace_start"() <{level = 10 : i32, message = "bpq,bqk->bpk"}> : () -> ()
    %cst_8 = arith.constant dense<0.000000e+00> : vector<2x8x8xf32>
    %27 = tpu.matmul %26, %14, %cst_8 {dimension_numbers = #tpu.dot_dimension_numbers<[2], [1], [1], [2], [0, 0, 0, 1, 1, 2], [0], [0]>} : vector<2x8x8xbf16>, vector<2x8x8xbf16>, vector<2x8x8xf32> -> vector<2x8x8xf32>
    "tpu.trace_stop"() : () -> ()
    %28 = vector.shape_cast %27 : vector<2x8x8xf32> to vector<16x8xf32>
    %29 = arith.truncf %28 : vector<16x8xf32> to vector<16x8xbf16>
    %c0_9 = arith.constant 0 : index
    %c0_10 = arith.constant 0 : index
    %30 = vector.load %arg15[%c0_9, %c0_10] : memref<16x32xbf16, #tpu.memory_space<vmem>>, vector<16x8xbf16>
    tpu.vector_store %arg15[%c0_9, %c0_10], %29 {strides = array<i32>} : memref<16x32xbf16, #tpu.memory_space<vmem>>, vector<16x8xbf16>,
    %31 = vector.extract_strided_slice %8 {offsets = [0, 0, 8], sizes = [2, 8, 8], strides = [1, 1, 1]} : vector<2x8x96xf32> to vector<2x8x8xf32>
    %32 = arith.truncf %31 : vector<2x8x8xf32> to vector<2x8x8xbf16>
    %33 = vector.extract_strided_slice %8 {offsets = [0, 0, 40], sizes = [2, 8, 8], strides = [1, 1, 1]} : vector<2x8x96xf32> to vector<2x8x8xf32>
    %34 = arith.truncf %33 : vector<2x8x8xf32> to vector<2x8x8xbf16>
    %35 = vector.extract_strided_slice %8 {offsets = [0, 0, 72], sizes = [2, 8, 8], strides = [1, 1, 1]} : vector<2x8x96xf32> to vector<2x8x8xf32>
    %36 = arith.truncf %35 : vector<2x8x8xf32> to vector<2x8x8xbf16>
    "tpu.trace_start"() <{level = 10 : i32, message = "bpk,bqk->bpq"}> : () -> ()
    %cst_11 = arith.constant dense<0.000000e+00> : vector<2x8x8xf32>
    %37 = tpu.matmul %32, %34, %cst_11 {dimension_numbers = #tpu.dot_dimension_numbers<[2], [2], [1], [1], [0, 0, 0, 1, 1, 1], [0], [0]>} : vector<2x8x8xbf16>, vector<2x8x8xbf16>, vector<2x8x8xf32> -> vector<2x8x8xf32>
    "tpu.trace_stop"() : () -> ()
    %cst_12 = arith.constant dense<0xFF800000> : vector<2x8xf32>
    %38 = vector.multi_reduction <maximumf>, %37, %cst_12 [2] : vector<2x8x8xf32> to vector<2x8xf32>
    %39 = vector.shape_cast %38 : vector<2x8xf32> to vector<2x8x1xf32>
    %40 = vector.broadcast %39 : vector<2x8x1xf32> to vector<2x8x8xf32>
    %41 = arith.subf %37, %40 : vector<2x8x8xf32>
    %42 = math.exp %41 : vector<2x8x8xf32>
    %cst_13 = arith.constant dense<0.000000e+00> : vector<2x8xf32>
    %43 = vector.multi_reduction <add>, %42, %cst_13 [2] : vector<2x8x8xf32> to vector<2x8xf32>
    %44 = vector.shape_cast %43 : vector<2x8xf32> to vector<2x8x1xf32>
    %45 = tpu.reciprocal %44 {approx = true} : vector<2x8x1xf32> -> vector<2x8x1xf32>
    %46 = vector.broadcast %45 : vector<2x8x1xf32> to vector<2x8x8xf32>
    %47 = arith.mulf %42, %46 : vector<2x8x8xf32>
    %48 = arith.truncf %47 : vector<2x8x8xf32> to vector<2x8x8xbf16>
    "tpu.trace_start"() <{level = 10 : i32, message = "bpq,bqk->bpk"}> : () -> ()
    %cst_14 = arith.constant dense<0.000000e+00> : vector<2x8x8xf32>
    %49 = tpu.matmul %48, %36, %cst_14 {dimension_numbers = #tpu.dot_dimension_numbers<[2], [1], [1], [2], [0, 0, 0, 1, 1, 2], [0], [0]>} : vector<2x8x8xbf16>, vector<2x8x8xbf16>, vector<2x8x8xf32> -> vector<2x8x8xf32>
    "tpu.trace_stop"() : () -> ()
    %50 = vector.shape_cast %49 : vector<2x8x8xf32> to vector<16x8xf32>
    %51 = arith.truncf %50 : vector<16x8xf32> to vector<16x8xbf16>
    %c0_15 = arith.constant 0 : index
    %c8 = arith.constant 8 : index
    %52 = vector.load %arg15[%c0_15, %c8] : memref<16x32xbf16, #tpu.memory_space<vmem>>, vector<16x8xbf16>
    tpu.vector_store %arg15[%c0_15, %c8], %51 {strides = array<i32>} : memref<16x32xbf16, #tpu.memory_space<vmem>>, vector<16x8xbf16>,
    %53 = vector.extract_strided_slice %8 {offsets = [0, 0, 16], sizes = [2, 8, 8], strides = [1, 1, 1]} : vector<2x8x96xf32> to vector<2x8x8xf32>
    %54 = arith.truncf %53 : vector<2x8x8xf32> to vector<2x8x8xbf16>
    %55 = vector.extract_strided_slice %8 {offsets = [0, 0, 48], sizes = [2, 8, 8], strides = [1, 1, 1]} : vector<2x8x96xf32> to vector<2x8x8xf32>
    %56 = arith.truncf %55 : vector<2x8x8xf32> to vector<2x8x8xbf16>
    %57 = vector.extract_strided_slice %8 {offsets = [0, 0, 80], sizes = [2, 8, 8], strides = [1, 1, 1]} : vector<2x8x96xf32> to vector<2x8x8xf32>
    %58 = arith.truncf %57 : vector<2x8x8xf32> to vector<2x8x8xbf16>
    "tpu.trace_start"() <{level = 10 : i32, message = "bpk,bqk->bpq"}> : () -> ()
    %cst_16 = arith.constant dense<0.000000e+00> : vector<2x8x8xf32>
    %59 = tpu.matmul %54, %56, %cst_16 {dimension_numbers = #tpu.dot_dimension_numbers<[2], [2], [1], [1], [0, 0, 0, 1, 1, 1], [0], [0]>} : vector<2x8x8xbf16>, vector<2x8x8xbf16>, vector<2x8x8xf32> -> vector<2x8x8xf32>
    "tpu.trace_stop"() : () -> ()
    %cst_17 = arith.constant dense<0xFF800000> : vector<2x8xf32>
    %60 = vector.multi_reduction <maximumf>, %59, %cst_17 [2] : vector<2x8x8xf32> to vector<2x8xf32>
    %61 = vector.shape_cast %60 : vector<2x8xf32> to vector<2x8x1xf32>
    %62 = vector.broadcast %61 : vector<2x8x1xf32> to vector<2x8x8xf32>
    %63 = arith.subf %59, %62 : vector<2x8x8xf32>
    %64 = math.exp %63 : vector<2x8x8xf32>
    %cst_18 = arith.constant dense<0.000000e+00> : vector<2x8xf32>
    %65 = vector.multi_reduction <add>, %64, %cst_18 [2] : vector<2x8x8xf32> to vector<2x8xf32>
    %66 = vector.shape_cast %65 : vector<2x8xf32> to vector<2x8x1xf32>
    %67 = tpu.reciprocal %66 {approx = true} : vector<2x8x1xf32> -> vector<2x8x1xf32>
    %68 = vector.broadcast %67 : vector<2x8x1xf32> to vector<2x8x8xf32>
    %69 = arith.mulf %64, %68 : vector<2x8x8xf32>
    %70 = arith.truncf %69 : vector<2x8x8xf32> to vector<2x8x8xbf16>
    "tpu.trace_start"() <{level = 10 : i32, message = "bpq,bqk->bpk"}> : () -> ()
    %cst_19 = arith.constant dense<0.000000e+00> : vector<2x8x8xf32>
    %71 = tpu.matmul %70, %58, %cst_19 {dimension_numbers = #tpu.dot_dimension_numbers<[2], [1], [1], [2], [0, 0, 0, 1, 1, 2], [0], [0]>} : vector<2x8x8xbf16>, vector<2x8x8xbf16>, vector<2x8x8xf32> -> vector<2x8x8xf32>
    "tpu.trace_stop"() : () -> ()
    %72 = vector.shape_cast %71 : vector<2x8x8xf32> to vector<16x8xf32>
    %73 = arith.truncf %72 : vector<16x8xf32> to vector<16x8xbf16>
    %c0_20 = arith.constant 0 : index
    %c16 = arith.constant 16 : index
    %74 = vector.load %arg15[%c0_20, %c16] : memref<16x32xbf16, #tpu.memory_space<vmem>>, vector<16x8xbf16>
    tpu.vector_store %arg15[%c0_20, %c16], %73 {strides = array<i32>} : memref<16x32xbf16, #tpu.memory_space<vmem>>, vector<16x8xbf16>,
    %75 = vector.extract_strided_slice %8 {offsets = [0, 0, 24], sizes = [2, 8, 8], strides = [1, 1, 1]} : vector<2x8x96xf32> to vector<2x8x8xf32>
    %76 = arith.truncf %75 : vector<2x8x8xf32> to vector<2x8x8xbf16>
    %77 = vector.extract_strided_slice %8 {offsets = [0, 0, 56], sizes = [2, 8, 8], strides = [1, 1, 1]} : vector<2x8x96xf32> to vector<2x8x8xf32>
    %78 = arith.truncf %77 : vector<2x8x8xf32> to vector<2x8x8xbf16>
    %79 = vector.extract_strided_slice %8 {offsets = [0, 0, 88], sizes = [2, 8, 8], strides = [1, 1, 1]} : vector<2x8x96xf32> to vector<2x8x8xf32>
    %80 = arith.truncf %79 : vector<2x8x8xf32> to vector<2x8x8xbf16>
    "tpu.trace_start"() <{level = 10 : i32, message = "bpk,bqk->bpq"}> : () -> ()
    %cst_21 = arith.constant dense<0.000000e+00> : vector<2x8x8xf32>
    %81 = tpu.matmul %76, %78, %cst_21 {dimension_numbers = #tpu.dot_dimension_numbers<[2], [2], [1], [1], [0, 0, 0, 1, 1, 1], [0], [0]>} : vector<2x8x8xbf16>, vector<2x8x8xbf16>, vector<2x8x8xf32> -> vector<2x8x8xf32>
    "tpu.trace_stop"() : () -> ()
    %cst_22 = arith.constant dense<0xFF800000> : vector<2x8xf32>
    %82 = vector.multi_reduction <maximumf>, %81, %cst_22 [2] : vector<2x8x8xf32> to vector<2x8xf32>
    %83 = vector.shape_cast %82 : vector<2x8xf32> to vector<2x8x1xf32>
    %84 = vector.broadcast %83 : vector<2x8x1xf32> to vector<2x8x8xf32>
    %85 = arith.subf %81, %84 : vector<2x8x8xf32>
    %86 = math.exp %85 : vector<2x8x8xf32>
    %cst_23 = arith.constant dense<0.000000e+00> : vector<2x8xf32>
    %87 = vector.multi_reduction <add>, %86, %cst_23 [2] : vector<2x8x8xf32> to vector<2x8xf32>
    %88 = vector.shape_cast %87 : vector<2x8xf32> to vector<2x8x1xf32>
    %89 = tpu.reciprocal %88 {approx = true} : vector<2x8x1xf32> -> vector<2x8x1xf32>
    %90 = vector.broadcast %89 : vector<2x8x1xf32> to vector<2x8x8xf32>
    %91 = arith.mulf %86, %90 : vector<2x8x8xf32>
    %92 = arith.truncf %91 : vector<2x8x8xf32> to vector<2x8x8xbf16>
    "tpu.trace_start"() <{level = 10 : i32, message = "bpq,bqk->bpk"}> : () -> ()
    %cst_24 = arith.constant dense<0.000000e+00> : vector<2x8x8xf32>
    %93 = tpu.matmul %92, %80, %cst_24 {dimension_numbers = #tpu.dot_dimension_numbers<[2], [1], [1], [2], [0, 0, 0, 1, 1, 2], [0], [0]>} : vector<2x8x8xbf16>, vector<2x8x8xbf16>, vector<2x8x8xf32> -> vector<2x8x8xf32>
    "tpu.trace_stop"() : () -> ()
    %94 = vector.shape_cast %93 : vector<2x8x8xf32> to vector<16x8xf32>
    %95 = arith.truncf %94 : vector<16x8xf32> to vector<16x8xbf16>
    %c0_25 = arith.constant 0 : index
    %c24 = arith.constant 24 : index
    %96 = vector.load %arg15[%c0_25, %c24] : memref<16x32xbf16, #tpu.memory_space<vmem>>, vector<16x8xbf16>
    tpu.vector_store %arg15[%c0_25, %c24], %95 {strides = array<i32>} : memref<16x32xbf16, #tpu.memory_space<vmem>>, vector<16x8xbf16>,
    %c0_26 = arith.constant 0 : index
    %c0_27 = arith.constant 0 : index
    %97 = vector.load %arg15[%c0_26, %c0_27] : memref<16x32xbf16, #tpu.memory_space<vmem>>, vector<16x32xbf16>
    %c0_28 = arith.constant 0 : index
    %c0_29 = arith.constant 0 : index
    %c0_30 = arith.constant 0 : index
    %98 = vector.load %arg3[%c0_28, %c0_29, %c0_30] : memref<1x32x32xbf16, #tpu.memory_space<vmem>>, vector<1x32x32xbf16>
    %99 = vector.shape_cast %98 : vector<1x32x32xbf16> to vector<32x32xbf16>
    %cst_31 = arith.constant dense<0.000000e+00> : vector<16x32xf32>
    %100 = tpu.matmul %97, %99, %cst_31 {dimension_numbers = #tpu.dot_dimension_numbers<[1], [0], [0], [1], [0, 0, 1, 1], [], []>} : vector<16x32xbf16>, vector<32x32xbf16>, vector<16x32xf32> -> vector<16x32xf32>
    %c0_32 = arith.constant 0 : index
    %c0_33 = arith.constant 0 : index
    %c0_34 = arith.constant 0 : index
    %101 = vector.load %arg4[%c0_32, %c0_33, %c0_34] : memref<1x1x32xf32, #tpu.memory_space<vmem>>, vector<1x1x32xf32>
    %102 = vector.shape_cast %101 : vector<1x1x32xf32> to vector<1x32xf32>
    %103 = vector.broadcast %102 : vector<1x32xf32> to vector<16x32xf32>
    %104 = arith.addf %100, %103 : vector<16x32xf32>
    %105 = arith.addf %3, %104 : vector<16x32xf32>
    %cst_35 = arith.constant dense<0.000000e+00> : vector<32xf32>
    %106 = vector.multi_reduction <add>, %105, %cst_35 [0] : vector<16x32xf32> to vector<32xf32>
    %107 = vector.shape_cast %106 : vector<32xf32> to vector<1x32xf32>
    %cst_36 = arith.constant 6.250000e-02 : f32
    %108 = vector.broadcast %cst_36 : f32 to vector<1x32xf32>
    %109 = arith.mulf %107, %108 : vector<1x32xf32>
    %110 = arith.mulf %105, %105 : vector<16x32xf32>
    %cst_37 = arith.constant dense<0.000000e+00> : vector<32xf32>
    %111 = vector.multi_reduction <add>, %110, %cst_37 [0] : vector<16x32xf32> to vector<32xf32>
    %112 = vector.shape_cast %111 : vector<32xf32> to vector<1x32xf32>
    %cst_38 = arith.constant 6.250000e-02 : f32
    %113 = vector.broadcast %cst_38 : f32 to vector<1x32xf32>
    %114 = arith.mulf %112, %113 : vector<1x32xf32>
    %115 = arith.mulf %109, %109 : vector<1x32xf32>
    %116 = arith.subf %114, %115 : vector<1x32xf32>
    %cst_39 = arith.constant 0.000000e+00 : f32
    %117 = vector.broadcast %cst_39 : f32 to vector<1x32xf32>
    %118 = arith.maximumf %116, %117 : vector<1x32xf32>
    %119 = vector.broadcast %109 : vector<1x32xf32> to vector<16x32xf32>
    %120 = arith.subf %105, %119 : vector<16x32xf32>
    %cst_40 = arith.constant 9.99999974E-6 : f32
    %121 = vector.broadcast %cst_40 : f32 to vector<1x32xf32>
    %122 = arith.addf %118, %121 : vector<1x32xf32>
    %123 = math.rsqrt %122 : vector<1x32xf32>
    %124 = vector.broadcast %123 : vector<1x32xf32> to vector<16x32xf32>
    %125 = arith.mulf %120, %124 : vector<16x32xf32>
    %c0_41 = arith.constant 0 : index
    %c0_42 = arith.constant 0 : index
    %c0_43 = arith.constant 0 : index
    %126 = vector.load %arg5[%c0_41, %c0_42, %c0_43] : memref<1x1x32xf32, #tpu.memory_space<vmem>>, vector<1x1x32xf32>
    %127 = vector.shape_cast %126 : vector<1x1x32xf32> to vector<1x32xf32>
    %128 = vector.broadcast %127 : vector<1x32xf32> to vector<16x32xf32>
    %129 = arith.mulf %125, %128 : vector<16x32xf32>
    %c0_44 = arith.constant 0 : index
    %c0_45 = arith.constant 0 : index
    %c0_46 = arith.constant 0 : index
    %130 = vector.load %arg6[%c0_44, %c0_45, %c0_46] : memref<1x1x32xf32, #tpu.memory_space<vmem>>, vector<1x1x32xf32>
    %131 = vector.shape_cast %130 : vector<1x1x32xf32> to vector<1x32xf32>
    %132 = vector.broadcast %131 : vector<1x32xf32> to vector<16x32xf32>
    %133 = arith.addf %129, %132 : vector<16x32xf32>
    %134 = arith.truncf %133 : vector<16x32xf32> to vector<16x32xbf16>
    %c0_47 = arith.constant 0 : index
    %c0_48 = arith.constant 0 : index
    %c0_49 = arith.constant 0 : index
    %135 = vector.load %arg7[%c0_47, %c0_48, %c0_49] : memref<1x32x64xbf16, #tpu.memory_space<vmem>>, vector<1x32x64xbf16>
    %136 = vector.shape_cast %135 : vector<1x32x64xbf16> to vector<32x64xbf16>
    %cst_50 = arith.constant dense<0.000000e+00> : vector<16x64xf32>
    %137 = tpu.matmul %134, %136, %cst_50 {dimension_numbers = #tpu.dot_dimension_numbers<[1], [0], [0], [1], [0, 0, 1, 1], [], []>} : vector<16x32xbf16>, vector<32x64xbf16>, vector<16x64xf32> -> vector<16x64xf32>
    %c0_51 = arith.constant 0 : index
    %c0_52 = arith.constant 0 : index
    %c0_53 = arith.constant 0 : index
    %138 = vector.load %arg8[%c0_51, %c0_52, %c0_53] : memref<1x1x64xf32, #tpu.memory_space<vmem>>, vector<1x1x64xf32>
    %139 = vector.shape_cast %138 : vector<1x1x64xf32> to vector<1x64xf32>
    %140 = vector.broadcast %139 : vector<1x64xf32> to vector<16x64xf32>
    %141 = arith.addf %137, %140 : vector<16x64xf32>
    %cst_54 = arith.constant 0.000000e+00 : f32
    %142 = vector.broadcast %cst_54 : f32 to vector<16x64xf32>
    %143 = arith.maximumf %141, %142 : vector<16x64xf32>
    %144 = arith.truncf %143 : vector<16x64xf32> to vector<16x64xbf16>
    %c0_55 = arith.constant 0 : index
    %c0_56 = arith.constant 0 : index
    %c0_57 = arith.constant 0 : index
    %145 = vector.load %arg9[%c0_55, %c0_56, %c0_57] : memref<1x64x32xbf16, #tpu.memory_space<vmem>>, vector<1x64x32xbf16>
    %146 = vector.shape_cast %145 : vector<1x64x32xbf16> to vector<64x32xbf16>
    %cst_58 = arith.constant dense<0.000000e+00> : vector<16x32xf32>
    %147 = tpu.matmul %144, %146, %cst_58 {dimension_numbers = #tpu.dot_dimension_numbers<[1], [0], [0], [1], [0, 0, 1, 1], [], []>} : vector<16x64xbf16>, vector<64x32xbf16>, vector<16x32xf32> -> vector<16x32xf32>
    %c0_59 = arith.constant 0 : index
    %c0_60 = arith.constant 0 : index
    %c0_61 = arith.constant 0 : index
    %148 = vector.load %arg10[%c0_59, %c0_60, %c0_61] : memref<1x1x32xf32, #tpu.memory_space<vmem>>, vector<1x1x32xf32>
    %149 = vector.shape_cast %148 : vector<1x1x32xf32> to vector<1x32xf32>
    %150 = vector.broadcast %149 : vector<1x32xf32> to vector<16x32xf32>
    %151 = arith.addf %147, %150 : vector<16x32xf32>
    %152 = arith.addf %133, %151 : vector<16x32xf32>
    %cst_62 = arith.constant dense<0.000000e+00> : vector<32xf32>
    %153 = vector.multi_reduction <add>, %152, %cst_62 [0] : vector<16x32xf32> to vector<32xf32>
    %154 = vector.shape_cast %153 : vector<32xf32> to vector<1x32xf32>
    %cst_63 = arith.constant 6.250000e-02 : f32
    %155 = vector.broadcast %cst_63 : f32 to vector<1x32xf32>
    %156 = arith.mulf %154, %155 : vector<1x32xf32>
    %157 = arith.mulf %152, %152 : vector<16x32xf32>
    %cst_64 = arith.constant dense<0.000000e+00> : vector<32xf32>
    %158 = vector.multi_reduction <add>, %157, %cst_64 [0] : vector<16x32xf32> to vector<32xf32>
    %159 = vector.shape_cast %158 : vector<32xf32> to vector<1x32xf32>
    %cst_65 = arith.constant 6.250000e-02 : f32
    %160 = vector.broadcast %cst_65 : f32 to vector<1x32xf32>
    %161 = arith.mulf %159, %160 : vector<1x32xf32>
    %162 = arith.mulf %156, %156 : vector<1x32xf32>
    %163 = arith.subf %161, %162 : vector<1x32xf32>
    %cst_66 = arith.constant 0.000000e+00 : f32
    %164 = vector.broadcast %cst_66 : f32 to vector<1x32xf32>
    %165 = arith.maximumf %163, %164 : vector<1x32xf32>
    %166 = vector.broadcast %156 : vector<1x32xf32> to vector<16x32xf32>
    %167 = arith.subf %152, %166 : vector<16x32xf32>
    %cst_67 = arith.constant 9.99999974E-6 : f32
    %168 = vector.broadcast %cst_67 : f32 to vector<1x32xf32>
    %169 = arith.addf %165, %168 : vector<1x32xf32>
    %170 = math.rsqrt %169 : vector<1x32xf32>
    %171 = vector.broadcast %170 : vector<1x32xf32> to vector<16x32xf32>
    %172 = arith.mulf %167, %171 : vector<16x32xf32>
    %c0_68 = arith.constant 0 : index
    %c0_69 = arith.constant 0 : index
    %c0_70 = arith.constant 0 : index
    %173 = vector.load %arg11[%c0_68, %c0_69, %c0_70] : memref<1x1x32xf32, #tpu.memory_space<vmem>>, vector<1x1x32xf32>
    %174 = vector.shape_cast %173 : vector<1x1x32xf32> to vector<1x32xf32>
    %175 = vector.broadcast %174 : vector<1x32xf32> to vector<16x32xf32>
    %176 = arith.mulf %172, %175 : vector<16x32xf32>
    %c0_71 = arith.constant 0 : index
    %c0_72 = arith.constant 0 : index
    %c0_73 = arith.constant 0 : index
    %177 = vector.load %arg12[%c0_71, %c0_72, %c0_73] : memref<1x1x32xf32, #tpu.memory_space<vmem>>, vector<1x1x32xf32>
    %178 = vector.shape_cast %177 : vector<1x1x32xf32> to vector<1x32xf32>
    %179 = vector.broadcast %178 : vector<1x32xf32> to vector<16x32xf32>
    %180 = arith.addf %176, %179 : vector<16x32xf32>
    %c0_74 = arith.constant 0 : index
    %c0_75 = arith.constant 0 : index
    %181 = vector.load %arg14[%c0_74, %c0_75] : memref<16x32xf32, #tpu.memory_space<vmem>>, vector<16x32xf32>
    tpu.vector_store %arg14[%c0_74, %c0_75], %180 {strides = array<i32>} : memref<16x32xf32, #tpu.memory_space<vmem>>, vector<16x32xf32>,
    %c1_i32 = arith.constant 1 : i32
    %182 = arith.cmpi eq, %arg0, %c1_i32 : i32
    %183 = arith.extui %182 : i1 to i32
    %c0_i32_76 = arith.constant 0 : i32
    %184 = arith.cmpi ne, %183, %c0_i32_76 : i32
    scf.if %184 {
      %185 = vector.shape_cast %180 : vector<16x32xf32> to vector<2x8x32xf32>
      %c0_77 = arith.constant 0 : index
      %c0_78 = arith.constant 0 : index
      %c0_79 = arith.constant 0 : index
      %186 = vector.load %arg13[%c0_77, %c0_78, %c0_79] : memref<2x8x32xf32, #tpu.memory_space<vmem>>, vector<2x8x32xf32>
      tpu.vector_store %arg13[%c0_77, %c0_78, %c0_79], %185 {strides = array<i32>} : memref<2x8x32xf32, #tpu.memory_space<vmem>>, vector<2x8x32xf32>,
    } else {
    }
    return
  }
  func.func @transform_0(%arg0: i32) -> (i32, i32, i32) {
    %c0_i32 = arith.constant 0 : i32
    %c0_i32_0 = arith.constant 0 : i32
    %c0_i32_1 = arith.constant 0 : i32
    %c0_i32_2 = arith.constant 0 : i32
    return %c0_i32, %c0_i32_0, %c0_i32_1 : i32, i32, i32
  }
  func.func @transform_1(%arg0: i32) -> (i32, i32, i32) {
    %c0_i32 = arith.constant 0 : i32
    %c0_i32_0 = arith.constant 0 : i32
    %c0_i32_1 = arith.constant 0 : i32
    return %arg0, %c0_i32, %c0_i32_0 : i32, i32, i32
  }
  func.func @transform_2(%arg0: i32) -> (i32, i32, i32) {
    %c0_i32 = arith.constant 0 : i32
    %c0_i32_0 = arith.constant 0 : i32
    %c0_i32_1 = arith.constant 0 : i32
    return %arg0, %c0_i32, %c0_i32_0 : i32, i32, i32
  }
  func.func @transform_3(%arg0: i32) -> (i32, i32, i32) {
    %c0_i32 = arith.constant 0 : i32
    %c0_i32_0 = arith.constant 0 : i32
    %c0_i32_1 = arith.constant 0 : i32
    return %arg0, %c0_i32, %c0_i32_0 : i32, i32, i32
  }
  func.func @transform_4(%arg0: i32) -> (i32, i32, i32) {
    %c0_i32 = arith.constant 0 : i32
    %c0_i32_0 = arith.constant 0 : i32
    %c0_i32_1 = arith.constant 0 : i32
    return %arg0, %c0_i32, %c0_i32_0 : i32, i32, i32
  }
  func.func @transform_5(%arg0: i32) -> (i32, i32, i32) {
    %c0_i32 = arith.constant 0 : i32
    %c0_i32_0 = arith.constant 0 : i32
    %c0_i32_1 = arith.constant 0 : i32
    return %arg0, %c0_i32, %c0_i32_0 : i32, i32, i32
  }
  func.func @transform_6(%arg0: i32) -> (i32, i32, i32) {
    %c0_i32 = arith.constant 0 : i32
    %c0_i32_0 = arith.constant 0 : i32
    %c0_i32_1 = arith.constant 0 : i32
    return %arg0, %c0_i32, %c0_i32_0 : i32, i32, i32
  }
  func.func @transform_7(%arg0: i32) -> (i32, i32, i32) {
    %c0_i32 = arith.constant 0 : i32
    %c0_i32_0 = arith.constant 0 : i32
    %c0_i32_1 = arith.constant 0 : i32
    return %arg0, %c0_i32, %c0_i32_0 : i32, i32, i32
  }
  func.func @transform_8(%arg0: i32) -> (i32, i32, i32) {
    %c0_i32 = arith.constant 0 : i32
    %c0_i32_0 = arith.constant 0 : i32
    %c0_i32_1 = arith.constant 0 : i32
    return %arg0, %c0_i32, %c0_i32_0 : i32, i32, i32
  }
  func.func @transform_9(%arg0: i32) -> (i32, i32, i32) {
    %c0_i32 = arith.constant 0 : i32
    %c0_i32_0 = arith.constant 0 : i32
    %c0_i32_1 = arith.constant 0 : i32
    return %arg0, %c0_i32, %c0_i32_0 : i32, i32, i32
  }
  func.func @transform_10(%arg0: i32) -> (i32, i32, i32) {
    %c0_i32 = arith.constant 0 : i32
    %c0_i32_0 = arith.constant 0 : i32
    %c0_i32_1 = arith.constant 0 : i32
    return %arg0, %c0_i32, %c0_i32_0 : i32, i32, i32
  }
  func.func @transform_11(%arg0: i32) -> (i32, i32, i32) {
    %c0_i32 = arith.constant 0 : i32
    %c0_i32_0 = arith.constant 0 : i32
    %c0_i32_1 = arith.constant 0 : i32
    return %arg0, %c0_i32, %c0_i32_0 : i32, i32, i32
  }
  func.func @transform_12(%arg0: i32) -> (i32, i32, i32) {
    %c0_i32 = arith.constant 0 : i32
    %c0_i32_0 = arith.constant 0 : i32
    %c0_i32_1 = arith.constant 0 : i32
    %c0_i32_2 = arith.constant 0 : i32
    return %c0_i32, %c0_i32_0, %c0_i32_1 : i32, i32, i32
  }
}

</mosaic_0001>

<llo_original>
// kernel: tpu_custom_call.1
$region0: #{tpu_custom_call.1}
  #allocation0 [shape = 'u32[]', space=smem, size = 0x4, offset = 0x4, fixed_abs, tag = 'smem constant byte address 0x4 - core index']
  #allocation1 [shape = 'u32[144,128]{1,0:T(1,128)}', space=vmem, size = 0x12000, scoped, tag = 'internal scratch']
  #allocation2 [shape = 'f32[16,32]{1,0:T(8,128)}', space=vmem, size = 0x2000, scoped, tag = 'scratch operand']
  #allocation3 [shape = 'bf16[16,32]{1,0:T(8,128)(2,1)}', space=vmem, size = 0x1000, scoped, tag = 'scratch operand']
  %s0 = inlined_call_operand.hbm [shape: f32[2,8,32], index: 0, kind: input, shape index: {}]
  %s1 = inlined_call_operand.vmem [shape: bf16[2,32,96], index: 1, kind: input, shape index: {}]
  %s2 = inlined_call_operand.vmem [shape: bf16[2,32,32], index: 2, kind: input, shape index: {}]
  %s3 = inlined_call_operand.vmem [shape: f32[2,1,32], index: 3, kind: input, shape index: {}]
  %s4 = inlined_call_operand.vmem [shape: f32[2,1,32], index: 4, kind: input, shape index: {}]
  %s5 = inlined_call_operand.vmem [shape: f32[2,1,32], index: 5, kind: input, shape index: {}]
  %s6 = inlined_call_operand.vmem [shape: bf16[2,32,64], index: 6, kind: input, shape index: {}]
  %s7 = inlined_call_operand.vmem [shape: f32[2,1,64], index: 7, kind: input, shape index: {}]
  %s8 = inlined_call_operand.vmem [shape: bf16[2,64,32], index: 8, kind: input, shape index: {}]
  %s9 = inlined_call_operand.vmem [shape: f32[2,1,32], index: 9, kind: input, shape index: {}]
  %s10 = inlined_call_operand.vmem [shape: f32[2,1,32], index: 10, kind: input, shape index: {}]
  %s11 = inlined_call_operand.vmem [shape: f32[2,1,32], index: 11, kind: input, shape index: {}]
  %s12 = inlined_call_operand.hbm [shape: f32[2,8,32], index: 12, kind: output, shape index: {}]
  %s13 = sld [smem:[#allocation0]]
  $region93: #{tpu_custom_call.1} parent=0
    _
  %s15 = ssub.s32 1, %s13
  %s16 = scalar_select 0, %s15, %s13
  $region1: #{tpu_custom_call.1} parent=0
    #allocation4 [shape = 'u8[8192]{0}', space=vmem, size = 0x2000, scoped, tag = 'input window, operand 0, single buffered']
    #allocation5 [shape = 's32[2]{0}', space=sflag, size = 0x8, scoped, tag = 'scoped memory for tpu_custom_call.1']
    #allocation6 [shape = 's32[2]{0}', space=sflag, size = 0x8, scoped, tag = 'scoped memory for tpu_custom_call.1']
    #allocation7 [shape = 'u8[8192]{0}', space=vmem, size = 0x2000, scoped, tag = 'output window, operand 0, single buffered']
    %17 = vsyncpa [#allocation5], 0
    %18 = vsyncpa [#allocation6], 0
    loop: start=0, step=1, limit=4
    $region2: #{tpu_custom_call.1} parent=1 // loop_pre_header
      _
    $region3: #{tpu_custom_call.1} parent=1 // loop_header
      %s20 = sphi 0, %s24
      %p21 = scmp.ge.s32.totalorder %s20, 4
      %s28 = sphi 0, %s28
      %s30 = sphi 0, %s28
      %s31 = sphi 0, %s30
      %s45 = sphi 0, %s31
      %s51 = sphi 0, %s53
      %s54 = sphi 0, %s51
      %s55 = sphi 0, %s54
      %s71 = sphi 0, %s55
      %s77 = sphi 0, %s79
      %s80 = sphi 0, %s77
      %s81 = sphi 0, %s80
      %s97 = sphi 0, %s81
      %s103 = sphi 0, %s105
      %s106 = sphi 0, %s103
      %s107 = sphi 0, %s106
      %s123 = sphi 0, %s107
      %s129 = sphi 0, %s131
      %s132 = sphi 0, %s129
      %s133 = sphi 0, %s132
      %s149 = sphi 0, %s133
      %s155 = sphi 0, %s157
      %s158 = sphi 0, %s155
      %s159 = sphi 0, %s158
      %s175 = sphi 0, %s159
      %s181 = sphi 0, %s183
      %s184 = sphi 0, %s181
      %s185 = sphi 0, %s184
      %s201 = sphi 0, %s185
      %s207 = sphi 0, %s209
      %s210 = sphi 0, %s207
      %s211 = sphi 0, %s210
      %s227 = sphi 0, %s211
      %s233 = sphi 0, %s235
      %s236 = sphi 0, %s233
      %s237 = sphi 0, %s236
      %s253 = sphi 0, %s237
      %s259 = sphi 0, %s261
      %s262 = sphi 0, %s259
      %s263 = sphi 0, %s262
      %s279 = sphi 0, %s263
      %s285 = sphi 0, %s287
      %s288 = sphi 0, %s285
      %s289 = sphi 0, %s288
      %s305 = sphi 0, %s289
      %s311 = sphi 0, %s313
      %s314 = sphi 0, %s311
      %s315 = sphi 0, %s314
      %s331 = sphi 0, %s315
      %s335 = sphi 0, %s335
      %s337 = sphi 0, %s335
      %s338 = sphi 0, %s337
      %s352 = sphi 0, %s338
    $region4: #{tpu_custom_call.1} parent=1 // loop_header_branch
      %23 = sbr.rel (%p21) target = $region8
    $region5: #{tpu_custom_call.1} parent=1 // loop_body
      %s25 = ssub.s32 %s20, 1
      %s26 = ssub.s32 %s20, 2
      %s27 = sadd.s32 %s20, 1
      %s29 = sadd.s32 %s28, 1
      %p32 = scmp.eq.s32.totalorder %s20, 1
      %p33 = scmp.ne.s32.totalorder %s28, %s30
      %p34 = scmp.eq.s32.totalorder %s20, 0
      %p35 = por %p33, %p34
      %p36 = scmp.ne.s32.totalorder %s28, %s30
      %p37 = scmp.eq.s32.totalorder %s25, 1
      %p38 = por %p36, %p37
      %p39 = scmp.ne.s32.totalorder %s30, %s31
      %p40 = scmp.eq.s32.totalorder %s25, 0
      %p41 = por %p39, %p40
      %p42 = scmp.ne.s32.totalorder %s30, %s31
      %p43 = scmp.eq.s32.totalorder %s26, 1
      %p44 = por %p42, %p43
      %p46 = scmp.ne.s32.totalorder %s31, %s45
      %p47 = scmp.eq.s32.totalorder %s26, 0
      %p48 = por %p46, %p47
      %s49 = ssub.s32 %s20, %s27
      %p50 = scmp.eq.s32.totalorder %s49, 0
      %s52 = sadd.s32 %s51, 1
      %s53 = scalar_select %p50, %s51, %s52
      %p56 = pneg %p50
      %p57 = scmp.eq.s32.totalorder %s20, 1
      %p58 = por %p56, %p57
      %p59 = scmp.ne.s32.totalorder %s51, %s54
      %p60 = scmp.eq.s32.totalorder %s20, 0
      %p61 = por %p59, %p60
      %p62 = scmp.ne.s32.totalorder %s51, %s54
      %p63 = scmp.eq.s32.totalorder %s25, 1
      %p64 = por %p62, %p63
      %p65 = scmp.ne.s32.totalorder %s54, %s55
      %p66 = scmp.eq.s32.totalorder %s25, 0
      %p67 = por %p65, %p66
      %p68 = scmp.ne.s32.totalorder %s54, %s55
      %p69 = scmp.eq.s32.totalorder %s26, 1
      %p70 = por %p68, %p69
      %p72 = scmp.ne.s32.totalorder %s55, %s71
      %p73 = scmp.eq.s32.totalorder %s26, 0
      %p74 = por %p72, %p73
      %s75 = ssub.s32 %s20, %s27
      %p76 = scmp.eq.s32.totalorder %s75, 0
      %s78 = sadd.s32 %s77, 1
      %s79 = scalar_select %p76, %s77, %s78
      %p82 = pneg %p76
      %p83 = scmp.eq.s32.totalorder %s20, 1
      %p84 = por %p82, %p83
      %p85 = scmp.ne.s32.totalorder %s77, %s80
      %p86 = scmp.eq.s32.totalorder %s20, 0
      %p87 = por %p85, %p86
      %p88 = scmp.ne.s32.totalorder %s77, %s80
      %p89 = scmp.eq.s32.totalorder %s25, 1
      %p90 = por %p88, %p89
      %p91 = scmp.ne.s32.totalorder %s80, %s81
      %p92 = scmp.eq.s32.totalorder %s25, 0
      %p93 = por %p91, %p92
      %p94 = scmp.ne.s32.totalorder %s80, %s81
      %p95 = scmp.eq.s32.totalorder %s26, 1
      %p96 = por %p94, %p95
      %p98 = scmp.ne.s32.totalorder %s81, %s97
      %p99 = scmp.eq.s32.totalorder %s26, 0
      %p100 = por %p98, %p99
      %s101 = ssub.s32 %s20, %s27
      %p102 = scmp.eq.s32.totalorder %s101, 0
      %s104 = sadd.s32 %s103, 1
      %s105 = scalar_select %p102, %s103, %s104
      %p108 = pneg %p102
      %p109 = scmp.eq.s32.totalorder %s20, 1
      %p110 = por %p108, %p109
      %p111 = scmp.ne.s32.totalorder %s103, %s106
      %p112 = scmp.eq.s32.totalorder %s20, 0
      %p113 = por %p111, %p112
      %p114 = scmp.ne.s32.totalorder %s103, %s106
      %p115 = scmp.eq.s32.totalorder %s25, 1
      %p116 = por %p114, %p115
      %p117 = scmp.ne.s32.totalorder %s106, %s107
      %p118 = scmp.eq.s32.totalorder %s25, 0
      %p119 = por %p117, %p118
      %p120 = scmp.ne.s32.totalorder %s106, %s107
      %p121 = scmp.eq.s32.totalorder %s26, 1
      %p122 = por %p120, %p121
      %p124 = scmp.ne.s32.totalorder %s107, %s123
      %p125 = scmp.eq.s32.totalorder %s26, 0
      %p126 = por %p124, %p125
      %s127 = ssub.s32 %s20, %s27
      %p128 = scmp.eq.s32.totalorder %s127, 0
      %s130 = sadd.s32 %s129, 1
      %s131 = scalar_select %p128, %s129, %s130
      %p134 = pneg %p128
      %p135 = scmp.eq.s32.totalorder %s20, 1
      %p136 = por %p134, %p135
      %p137 = scmp.ne.s32.totalorder %s129, %s132
      %p138 = scmp.eq.s32.totalorder %s20, 0
      %p139 = por %p137, %p138
      %p140 = scmp.ne.s32.totalorder %s129, %s132
      %p141 = scmp.eq.s32.totalorder %s25, 1
      %p142 = por %p140, %p141
      %p143 = scmp.ne.s32.totalorder %s132, %s133
      %p144 = scmp.eq.s32.totalorder %s25, 0
      %p145 = por %p143, %p144
      %p146 = scmp.ne.s32.totalorder %s132, %s133
      %p147 = scmp.eq.s32.totalorder %s26, 1
      %p148 = por %p146, %p147
      %p150 = scmp.ne.s32.totalorder %s133, %s149
      %p151 = scmp.eq.s32.totalorder %s26, 0
      %p152 = por %p150, %p151
      %s153 = ssub.s32 %s20, %s27
      %p154 = scmp.eq.s32.totalorder %s153, 0
      %s156 = sadd.s32 %s155, 1
      %s157 = scalar_select %p154, %s155, %s156
      %p160 = pneg %p154
      %p161 = scmp.eq.s32.totalorder %s20, 1
      %p162 = por %p160, %p161
      %p163 = scmp.ne.s32.totalorder %s155, %s158
      %p164 = scmp.eq.s32.totalorder %s20, 0
      %p165 = por %p163, %p164
      %p166 = scmp.ne.s32.totalorder %s155, %s158
      %p167 = scmp.eq.s32.totalorder %s25, 1
      %p168 = por %p166, %p167
      %p169 = scmp.ne.s32.totalorder %s158, %s159
      %p170 = scmp.eq.s32.totalorder %s25, 0
      %p171 = por %p169, %p170
      %p172 = scmp.ne.s32.totalorder %s158, %s159
      %p173 = scmp.eq.s32.totalorder %s26, 1
      %p174 = por %p172, %p173
      %p176 = scmp.ne.s32.totalorder %s159, %s175
      %p177 = scmp.eq.s32.totalorder %s26, 0
      %p178 = por %p176, %p177
      %s179 = ssub.s32 %s20, %s27
      %p180 = scmp.eq.s32.totalorder %s179, 0
      %s182 = sadd.s32 %s181, 1
      %s183 = scalar_select %p180, %s181, %s182
      %p186 = pneg %p180
      %p187 = scmp.eq.s32.totalorder %s20, 1
      %p188 = por %p186, %p187
      %p189 = scmp.ne.s32.totalorder %s181, %s184
      %p190 = scmp.eq.s32.totalorder %s20, 0
      %p191 = por %p189, %p190
      %p192 = scmp.ne.s32.totalorder %s181, %s184
      %p193 = scmp.eq.s32.totalorder %s25, 1
      %p194 = por %p192, %p193
      %p195 = scmp.ne.s32.totalorder %s184, %s185
      %p196 = scmp.eq.s32.totalorder %s25, 0
      %p197 = por %p195, %p196
      %p198 = scmp.ne.s32.totalorder %s184, %s185
      %p199 = scmp.eq.s32.totalorder %s26, 1
      %p200 = por %p198, %p199
      %p202 = scmp.ne.s32.totalorder %s185, %s201
      %p203 = scmp.eq.s32.totalorder %s26, 0
      %p204 = por %p202, %p203
      %s205 = ssub.s32 %s20, %s27
      %p206 = scmp.eq.s32.totalorder %s205, 0
      %s208 = sadd.s32 %s207, 1
      %s209 = scalar_select %p206, %s207, %s208
      %p212 = pneg %p206
      %p213 = scmp.eq.s32.totalorder %s20, 1
      %p214 = por %p212, %p213
      %p215 = scmp.ne.s32.totalorder %s207, %s210
      %p216 = scmp.eq.s32.totalorder %s20, 0
      %p217 = por %p215, %p216
      %p218 = scmp.ne.s32.totalorder %s207, %s210
      %p219 = scmp.eq.s32.totalorder %s25, 1
      %p220 = por %p218, %p219
      %p221 = scmp.ne.s32.totalorder %s210, %s211
      %p222 = scmp.eq.s32.totalorder %s25, 0
      %p223 = por %p221, %p222
      %p224 = scmp.ne.s32.totalorder %s210, %s211
      %p225 = scmp.eq.s32.totalorder %s26, 1
      %p226 = por %p224, %p225
      %p228 = scmp.ne.s32.totalorder %s211, %s227
      %p229 = scmp.eq.s32.totalorder %s26, 0
      %p230 = por %p228, %p229
      %s231 = ssub.s32 %s20, %s27
      %p232 = scmp.eq.s32.totalorder %s231, 0
      %s234 = sadd.s32 %s233, 1
      %s235 = scalar_select %p232, %s233, %s234
      %p238 = pneg %p232
      %p239 = scmp.eq.s32.totalorder %s20, 1
      %p240 = por %p238, %p239
      %p241 = scmp.ne.s32.totalorder %s233, %s236
      %p242 = scmp.eq.s32.totalorder %s20, 0
      %p243 = por %p241, %p242
      %p244 = scmp.ne.s32.totalorder %s233, %s236
      %p245 = scmp.eq.s32.totalorder %s25, 1
      %p246 = por %p244, %p245
      %p247 = scmp.ne.s32.totalorder %s236, %s237
      %p248 = scmp.eq.s32.totalorder %s25, 0
      %p249 = por %p247, %p248
      %p250 = scmp.ne.s32.totalorder %s236, %s237
      %p251 = scmp.eq.s32.totalorder %s26, 1
      %p252 = por %p250, %p251
      %p254 = scmp.ne.s32.totalorder %s237, %s253
      %p255 = scmp.eq.s32.totalorder %s26, 0
      %p256 = por %p254, %p255
      %s257 = ssub.s32 %s20, %s27
      %p258 = scmp.eq.s32.totalorder %s257, 0
      %s260 = sadd.s32 %s259, 1
      %s261 = scalar_select %p258, %s259, %s260
      %p264 = pneg %p258
      %p265 = scmp.eq.s32.totalorder %s20, 1
      %p266 = por %p264, %p265
      %p267 = scmp.ne.s32.totalorder %s259, %s262
      %p268 = scmp.eq.s32.totalorder %s20, 0
      %p269 = por %p267, %p268
      %p270 = scmp.ne.s32.totalorder %s259, %s262
      %p271 = scmp.eq.s32.totalorder %s25, 1
      %p272 = por %p270, %p271
      %p273 = scmp.ne.s32.totalorder %s262, %s263
      %p274 = scmp.eq.s32.totalorder %s25, 0
      %p275 = por %p273, %p274
      %p276 = scmp.ne.s32.totalorder %s262, %s263
      %p277 = scmp.eq.s32.totalorder %s26, 1
      %p278 = por %p276, %p277
      %p280 = scmp.ne.s32.totalorder %s263, %s279
      %p281 = scmp.eq.s32.totalorder %s26, 0
      %p282 = por %p280, %p281
      %s283 = ssub.s32 %s20, %s27
      %p284 = scmp.eq.s32.totalorder %s283, 0
      %s286 = sadd.s32 %s285, 1
      %s287 = scalar_select %p284, %s285, %s286
      %p290 = pneg %p284
      %p291 = scmp.eq.s32.totalorder %s20, 1
      %p292 = por %p290, %p291
      %p293 = scmp.ne.s32.totalorder %s285, %s288
      %p294 = scmp.eq.s32.totalorder %s20, 0
      %p295 = por %p293, %p294
      %p296 = scmp.ne.s32.totalorder %s285, %s288
      %p297 = scmp.eq.s32.totalorder %s25, 1
      %p298 = por %p296, %p297
      %p299 = scmp.ne.s32.totalorder %s288, %s289
      %p300 = scmp.eq.s32.totalorder %s25, 0
      %p301 = por %p299, %p300
      %p302 = scmp.ne.s32.totalorder %s288, %s289
      %p303 = scmp.eq.s32.totalorder %s26, 1
      %p304 = por %p302, %p303
      %p306 = scmp.ne.s32.totalorder %s289, %s305
      %p307 = scmp.eq.s32.totalorder %s26, 0
      %p308 = por %p306, %p307
      %s309 = ssub.s32 %s20, %s27
      %p310 = scmp.eq.s32.totalorder %s309, 0
      %s312 = sadd.s32 %s311, 1
      %s313 = scalar_select %p310, %s311, %s312
      %p316 = pneg %p310
      %p317 = scmp.eq.s32.totalorder %s20, 1
      %p318 = por %p316, %p317
      %p319 = scmp.ne.s32.totalorder %s311, %s314
      %p320 = scmp.eq.s32.totalorder %s20, 0
      %p321 = por %p319, %p320
      %p322 = scmp.ne.s32.totalorder %s311, %s314
      %p323 = scmp.eq.s32.totalorder %s25, 1
      %p324 = por %p322, %p323
      %p325 = scmp.ne.s32.totalorder %s314, %s315
      %p326 = scmp.eq.s32.totalorder %s25, 0
      %p327 = por %p325, %p326
      %p328 = scmp.ne.s32.totalorder %s314, %s315
      %p329 = scmp.eq.s32.totalorder %s26, 1
      %p330 = por %p328, %p329
      %p332 = scmp.ne.s32.totalorder %s315, %s331
      %p333 = scmp.eq.s32.totalorder %s26, 0
      %p334 = por %p332, %p333
      %s336 = sadd.s32 %s335, 1
      %p339 = scmp.eq.s32.totalorder %s20, 1
      %p340 = scmp.ne.s32.totalorder %s335, %s337
      %p341 = scmp.eq.s32.totalorder %s20, 0
      %p342 = por %p340, %p341
      %p343 = scmp.ne.s32.totalorder %s335, %s337
      %p344 = scmp.eq.s32.totalorder %s25, 1
      %p345 = por %p343, %p344
      %p346 = scmp.ne.s32.totalorder %s337, %s338
      %p347 = scmp.eq.s32.totalorder %s25, 0
      %p348 = por %p346, %p347
      %p349 = scmp.ne.s32.totalorder %s337, %s338
      %p350 = scmp.eq.s32.totalorder %s26, 1
      %p351 = por %p349, %p350
      %p353 = scmp.ne.s32.totalorder %s338, %s352
      %p354 = scmp.eq.s32.totalorder %s26, 0
      %p355 = por %p353, %p354
      %p356 = scmp.le.s32.totalorder 1, %s20
      %p357 = scmp.lt.s32.totalorder %s20, 3
      %p358 = pnand %p356, %p357
      %p359 = pneg %p358
      // Predicated region
      $region9: #{tpu_custom_call.1} parent=5 // pred_check
        _
      $region10: #{tpu_custom_call.1} parent=5 // pred_check_branch
        %361 = sbr.rel (%p358) target = $region12
      $region11: #{tpu_custom_call.1} parent=5 // pred_region
        %s362 = ssub.s32 %s20, 1
        // Predicated region
        $region13: #{tpu_custom_call.1} parent=11 // pred_check
          %p363 = pneg %p41
        $region14: #{tpu_custom_call.1} parent=11 // pred_check_branch
          %365 = sbr.rel (%p363) target = $region16
        $region15: #{tpu_custom_call.1} parent=11 // pred_region
          %s367 = ssub.s32 256, 256
          %368 = vsyncadd [#allocation5], %s367
          %s369 = sshll.u32 [#allocation4], 4
          %s370 = int_to_ptr.vmem [resolvable:$true] %s369
          %375 = dma.hbm_to_vmem [thread:$0]  %s0, 256, %s370, [#allocation5], 128, 128, 8
        $region16: #{tpu_custom_call.1} parent=11 // pred_fallthru
          _
      $region12: #{tpu_custom_call.1} parent=5 // pred_fallthru
        _
      %p376 = scmp.lt.s32.totalorder %s20, 2
      // Predicated region
      $region17: #{tpu_custom_call.1} parent=5 // pred_check
        %p377 = pneg %p376
      $region18: #{tpu_custom_call.1} parent=5 // pred_check_branch
        %379 = sbr.rel (%p377) target = $region20
      $region19: #{tpu_custom_call.1} parent=5 // pred_region
        // Predicated region
        $region21: #{tpu_custom_call.1} parent=19 // pred_check
          %p380 = pneg %p61
        $region22: #{tpu_custom_call.1} parent=19 // pred_check_branch
          %382 = sbr.rel (%p380) target = $region24
        $region23: #{tpu_custom_call.1} parent=19 // pred_region
          %p383 = scmp.lt.s32.totalorder %s20, 1
          %s384 = scalar_select %p383, %s20, 1
          %s385 = smul.addr %s384, 4
          %s386 = smul.addr %s385, 4
          %s387 = scalar_lea.vmem %s1, %s386
        $region24: #{tpu_custom_call.1} parent=19 // pred_fallthru
          _
        // Predicated region
        $region25: #{tpu_custom_call.1} parent=19 // pred_check
          %p388 = pneg %p87
        $region26: #{tpu_custom_call.1} parent=19 // pred_check_branch
          %390 = sbr.rel (%p388) target = $region28
        $region27: #{tpu_custom_call.1} parent=19 // pred_region
          %p391 = scmp.lt.s32.totalorder %s20, 1
          %s392 = scalar_select %p391, %s20, 1
          %s393 = smul.addr %s392, 4
          %s394 = smul.addr %s393, 4
          %s395 = scalar_lea.vmem %s2, %s394
        $region28: #{tpu_custom_call.1} parent=19 // pred_fallthru
          _
        // Predicated region
        $region29: #{tpu_custom_call.1} parent=19 // pred_check
          %p396 = pneg %p113
        $region30: #{tpu_custom_call.1} parent=19 // pred_check_branch
          %398 = sbr.rel (%p396) target = $region32
        $region31: #{tpu_custom_call.1} parent=19 // pred_region
          %p399 = scmp.lt.s32.totalorder %s20, 1
          %s400 = scalar_select %p399, %s20, 1
          %s401 = scalar_lea.vmem %s3, %s400
        $region32: #{tpu_custom_call.1} parent=19 // pred_fallthru
          _
        // Predicated region
        $region33: #{tpu_custom_call.1} parent=19 // pred_check
          %p402 = pneg %p139
        $region34: #{tpu_custom_call.1} parent=19 // pred_check_branch
          %404 = sbr.rel (%p402) target = $region36
        $region35: #{tpu_custom_call.1} parent=19 // pred_region
          %p405 = scmp.lt.s32.totalorder %s20, 1
          %s406 = scalar_select %p405, %s20, 1
          %s407 = scalar_lea.vmem %s4, %s406
        $region36: #{tpu_custom_call.1} parent=19 // pred_fallthru
          _
        // Predicated region
        $region37: #{tpu_custom_call.1} parent=19 // pred_check
          %p408 = pneg %p165
        $region38: #{tpu_custom_call.1} parent=19 // pred_check_branch
          %410 = sbr.rel (%p408) target = $region40
        $region39: #{tpu_custom_call.1} parent=19 // pred_region
          %p411 = scmp.lt.s32.totalorder %s20, 1
          %s412 = scalar_select %p411, %s20, 1
          %s413 = scalar_lea.vmem %s5, %s412
        $region40: #{tpu_custom_call.1} parent=19 // pred_fallthru
          _
        // Predicated region
        $region41: #{tpu_custom_call.1} parent=19 // pred_check
          %p414 = pneg %p191
        $region42: #{tpu_custom_call.1} parent=19 // pred_check_branch
          %416 = sbr.rel (%p414) target = $region44
        $region43: #{tpu_custom_call.1} parent=19 // pred_region
          %p417 = scmp.lt.s32.totalorder %s20, 1
          %s418 = scalar_select %p417, %s20, 1
          %s419 = smul.addr %s418, 4
          %s420 = smul.addr %s419, 4
          %s421 = scalar_lea.vmem %s6, %s420
        $region44: #{tpu_custom_call.1} parent=19 // pred_fallthru
          _
        // Predicated region
        $region45: #{tpu_custom_call.1} parent=19 // pred_check
          %p422 = pneg %p217
        $region46: #{tpu_custom_call.1} parent=19 // pred_check_branch
          %424 = sbr.rel (%p422) target = $region48
        $region47: #{tpu_custom_call.1} parent=19 // pred_region
          %p425 = scmp.lt.s32.totalorder %s20, 1
          %s426 = scalar_select %p425, %s20, 1
          %s427 = scalar_lea.vmem %s7, %s426
        $region48: #{tpu_custom_call.1} parent=19 // pred_fallthru
          _
        // Predicated region
        $region49: #{tpu_custom_call.1} parent=19 // pred_check
          %p428 = pneg %p243
        $region50: #{tpu_custom_call.1} parent=19 // pred_check_branch
          %430 = sbr.rel (%p428) target = $region52
        $region51: #{tpu_custom_call.1} parent=19 // pred_region
          %p431 = scmp.lt.s32.totalorder %s20, 1
          %s432 = scalar_select %p431, %s20, 1
          %s433 = smul.addr %s432, 8
          %s434 = smul.addr %s433, 4
          %s435 = scalar_lea.vmem %s8, %s434
        $region52: #{tpu_custom_call.1} parent=19 // pred_fallthru
          _
        // Predicated region
        $region53: #{tpu_custom_call.1} parent=19 // pred_check
          %p436 = pneg %p269
        $region54: #{tpu_custom_call.1} parent=19 // pred_check_branch
          %438 = sbr.rel (%p436) target = $region56
        $region55: #{tpu_custom_call.1} parent=19 // pred_region
          %p439 = scmp.lt.s32.totalorder %s20, 1
          %s440 = scalar_select %p439, %s20, 1
          %s441 = scalar_lea.vmem %s9, %s440
        $region56: #{tpu_custom_call.1} parent=19 // pred_fallthru
          _
        // Predicated region
        $region57: #{tpu_custom_call.1} parent=19 // pred_check
          %p442 = pneg %p295
        $region58: #{tpu_custom_call.1} parent=19 // pred_check_branch
          %444 = sbr.rel (%p442) target = $region60
        $region59: #{tpu_custom_call.1} parent=19 // pred_region
          %p445 = scmp.lt.s32.totalorder %s20, 1
          %s446 = scalar_select %p445, %s20, 1
          %s447 = scalar_lea.vmem %s10, %s446
        $region60: #{tpu_custom_call.1} parent=19 // pred_fallthru
          _
        // Predicated region
        $region61: #{tpu_custom_call.1} parent=19 // pred_check
          %p448 = pneg %p321
        $region62: #{tpu_custom_call.1} parent=19 // pred_check_branch
          %450 = sbr.rel (%p448) target = $region64
        $region63: #{tpu_custom_call.1} parent=19 // pred_region
          %p451 = scmp.lt.s32.totalorder %s20, 1
          %s452 = scalar_select %p451, %s20, 1
          %s453 = scalar_lea.vmem %s11, %s452
        $region64: #{tpu_custom_call.1} parent=19 // pred_fallthru
          _
      $region20: #{tpu_custom_call.1} parent=5 // pred_fallthru
        _
      %p454 = scmp.le.s32.totalorder 1, %s20
      %p455 = scmp.lt.s32.totalorder %s20, 3
      %p456 = pnand %p454, %p455
      %p457 = pneg %p456
      // Predicated region
      $region65: #{tpu_custom_call.1} parent=5 // pred_check
        _
      $region66: #{tpu_custom_call.1} parent=5 // pred_check_branch
        %459 = sbr.rel (%p456) target = $region68
      $region67: #{tpu_custom_call.1} parent=5 // pred_region
        %s460 = ssub.s32 %s20, 1
        // Predicated region
        $region69: #{tpu_custom_call.1} parent=67 // pred_check
          %p461 = pneg %p41
        $region70: #{tpu_custom_call.1} parent=67 // pred_check_branch
          %463 = sbr.rel (%p461) target = $region72
        $region71: #{tpu_custom_call.1} parent=67 // pred_region
          %464 = dma.done [#allocation5], 256
        $region72: #{tpu_custom_call.1} parent=67 // pred_fallthru
          _
        %p465 = pneg %p41
        %p466 = pneg %p38
        %p467 = scmp.lt.s32.totalorder %s25, 1
        %s468 = scalar_select %p467, %s25, 1
        %s469 = smul.addr %s468, 4
        %s470 = smul.addr %s469, 4
        %s471 = scalar_lea.vmem %s1, %s470
        %p472 = pneg %p67
        %p473 = pneg %p64
        %p474 = scmp.lt.s32.totalorder %s25, 1
        %s475 = scalar_select %p474, %s25, 1
        %s476 = smul.addr %s475, 4
        %s477 = smul.addr %s476, 4
        %s478 = scalar_lea.vmem %s2, %s477
        %p479 = pneg %p93
        %p480 = pneg %p90
        %p481 = scmp.lt.s32.totalorder %s25, 1
        %s482 = scalar_select %p481, %s25, 1
        %s483 = scalar_lea.vmem %s3, %s482
        %p484 = pneg %p119
        %p485 = pneg %p116
        %p486 = scmp.lt.s32.totalorder %s25, 1
        %s487 = scalar_select %p486, %s25, 1
        %s488 = scalar_lea.vmem %s4, %s487
        %p489 = pneg %p145
        %p490 = pneg %p142
        %p491 = scmp.lt.s32.totalorder %s25, 1
        %s492 = scalar_select %p491, %s25, 1
        %s493 = scalar_lea.vmem %s5, %s492
        %p494 = pneg %p171
        %p495 = pneg %p168
        %p496 = scmp.lt.s32.totalorder %s25, 1
        %s497 = scalar_select %p496, %s25, 1
        %s498 = smul.addr %s497, 4
        %s499 = smul.addr %s498, 4
        %s500 = scalar_lea.vmem %s6, %s499
        %p501 = pneg %p197
        %p502 = pneg %p194
        %p503 = scmp.lt.s32.totalorder %s25, 1
        %s504 = scalar_select %p503, %s25, 1
        %s505 = scalar_lea.vmem %s7, %s504
        %p506 = pneg %p223
        %p507 = pneg %p220
        %p508 = scmp.lt.s32.totalorder %s25, 1
        %s509 = scalar_select %p508, %s25, 1
        %s510 = smul.addr %s509, 8
        %s511 = smul.addr %s510, 4
        %s512 = scalar_lea.vmem %s8, %s511
        %p513 = pneg %p249
        %p514 = pneg %p246
        %p515 = scmp.lt.s32.totalorder %s25, 1
        %s516 = scalar_select %p515, %s25, 1
        %s517 = scalar_lea.vmem %s9, %s516
        %p518 = pneg %p275
        %p519 = pneg %p272
        %p520 = scmp.lt.s32.totalorder %s25, 1
        %s521 = scalar_select %p520, %s25, 1
        %s522 = scalar_lea.vmem %s10, %s521
        %p523 = pneg %p301
        %p524 = pneg %p298
        %p525 = scmp.lt.s32.totalorder %s25, 1
        %s526 = scalar_select %p525, %s25, 1
        %s527 = scalar_lea.vmem %s11, %s526
        %p528 = pneg %p327
        %p529 = pneg %p324
        %p530 = pneg %p348
        %p531 = pneg %p345
        %p532 = scmp.lt.s32.totalorder %s25, 1
        %s533 = scalar_select %p532, %s25, 1
        %s534 = smul.addr %s533, 4
        %s535 = smul.addr %s534, 4
        %s536 = scalar_lea.vmem %s1, %s535
        %p537 = scmp.lt.s32.totalorder %s25, 1
        %s538 = scalar_select %p537, %s25, 1
        %s539 = smul.addr %s538, 4
        %s540 = smul.addr %s539, 4
        %s541 = scalar_lea.vmem %s2, %s540
        %p542 = scmp.lt.s32.totalorder %s25, 1
        %s543 = scalar_select %p542, %s25, 1
        %s544 = scalar_lea.vmem %s3, %s543
        %p545 = scmp.lt.s32.totalorder %s25, 1
        %s546 = scalar_select %p545, %s25, 1
        %s547 = scalar_lea.vmem %s4, %s546
        %p548 = scmp.lt.s32.totalorder %s25, 1
        %s549 = scalar_select %p548, %s25, 1
        %s550 = scalar_lea.vmem %s5, %s549
        %p551 = scmp.lt.s32.totalorder %s25, 1
        %s552 = scalar_select %p551, %s25, 1
        %s553 = smul.addr %s552, 4
        %s554 = smul.addr %s553, 4
        %s555 = scalar_lea.vmem %s6, %s554
        %p556 = scmp.lt.s32.totalorder %s25, 1
        %s557 = scalar_select %p556, %s25, 1
        %s558 = scalar_lea.vmem %s7, %s557
        %p559 = scmp.lt.s32.totalorder %s25, 1
        %s560 = scalar_select %p559, %s25, 1
        %s561 = smul.addr %s560, 8
        %s562 = smul.addr %s561, 4
        %s563 = scalar_lea.vmem %s8, %s562
        %p564 = scmp.lt.s32.totalorder %s25, 1
        %s565 = scalar_select %p564, %s25, 1
        %s566 = scalar_lea.vmem %s9, %s565
        %p567 = scmp.lt.s32.totalorder %s25, 1
        %s568 = scalar_select %p567, %s25, 1
        %s569 = scalar_lea.vmem %s10, %s568
        %p570 = scmp.lt.s32.totalorder %s25, 1
        %s571 = scalar_select %p570, %s25, 1
        %s572 = scalar_lea.vmem %s11, %s571
        %p574 = scmp.eq.s32.totalorder %s25, 0
        // Predicated region
        $region73: #{tpu_custom_call.1} parent=67 // pred_check
          %p575 = pneg %p574
        $region74: #{tpu_custom_call.1} parent=67 // pred_check_branch
          %577 = sbr.rel (%p575) target = $region76
        $region75: #{tpu_custom_call.1} parent=67 // pred_region
          %v578 = vld [vmem:[#allocation4] sm:$0xff]
          %v579 = vld [vmem:[#allocation4 + $0x8] sm:$0xff]
          %vm580 = vcmask 261120
          %581 = vst.msk [vmem:[#allocation2] sm:$0xff] %vm580, %v578
          %582 = vst.msk [vmem:[#allocation2 + $0x8] sm:$0xff] %vm580, %v579
        $region76: #{tpu_custom_call.1} parent=67 // pred_fallthru
          _
        %v583 = vld [vmem:[#allocation2] sm:$0xff]
        %v584 = vld [vmem:[#allocation2 + $0x8] sm:$0xff]
        %v585 = vpack.c.bf16 %v584, %v583
        %v586 = vld [vmem:[%s536] sm:$0xf]
        %v587 = vld [vmem:[%s536 + $0x4] sm:$0xf]
        %v588 = vld [vmem:[%s536 + $0x8] sm:$0xf]
        %v589 = vld [vmem:[%s536 + $0xc] sm:$0xf]
        %v594 = vunpack.c.l.b16 %v586
        %v595 = vunpack.c.l.b16 %v587
        %v596 = vunpack.c.l.b16 %v588
        %v597 = vunpack.c.l.b16 %v589
        %v598 = vpack.c.b16 %v595, %v594
        %v599 = vpack.c.b16 %v597, %v596
        %vm602 = vcmask 261120
        %v604 = vsel %vm602, %v585, 0
        %606 = vmatprep.subr.bf16.mxu0 0
        %607 = vmatpush1.bf16.msra.mxu0 0
        %608 = vmatprep.subr.bf16.mxu0 0
        %609 = vmatpush1.bf16.msra.mxu0 0
        %610 = vmatprep.subr.bf16.mxu0 0
        %611 = vmatpush1.bf16.msra.mxu0 0
        %612 = vmatprep.subr.bf16.mxu0 0
        %613 = vmatpush1.bf16.msra.mxu0 0
        %614 = vmatprep.subr.bf16.mxu0 0
        %615 = vmatpush1.bf16.msra.mxu0 0
        %616 = vmatprep.subr.bf16.mxu0 0
        %617 = vmatpush1.bf16.msra.mxu0 0
        %618 = vmatprep.subr.bf16.mxu0 0
        %619 = vmatpush1.bf16.msra.mxu0 %v599
        %620 = vmatprep.subr.bf16.mxu0 0
        %621 = vmatpush1.bf16.msra.mxu0 %v598
        %622 = vmatprep.subr.bf16.mxu0 0
        %623 = vmatpush2.bf16.msra.mxu0 0
        %624 = vmatprep.subr.bf16.mxu0 0
        %625 = vmatpush2.bf16.msra.mxu0 0
        %626 = vmatprep.subr.bf16.mxu0 0
        %627 = vmatpush2.bf16.msra.mxu0 0
        %628 = vmatprep.subr.bf16.mxu0 0
        %629 = vmatpush2.bf16.msra.mxu0 0
        %630 = vmatprep.subr.bf16.mxu0 0
        %631 = vmatpush2.bf16.msra.mxu0 0
        %632 = vmatprep.subr.bf16.mxu0 0
        %633 = vmatpush2.bf16.msra.mxu0 0
        %634 = vmatprep.subr.bf16.mxu0 0
        %635 = vmatpush2.bf16.msra.mxu0 0
        %636 = vmatprep.subr.bf16.mxu0 0
        %637 = vmatpush2.bf16.msra.mxu0 0
        %638 = vmatprep.mubr.bf16.mxu0 0
        %639 = vmatmul.mubr.bf16.gmra.mxu0 %v604
        %v640 = vpop.f32.mrf.mxu0
        %v641 = vadd.f32 0.0, %v640
        %v642 = vpop.f32.mrf.mxu0
        %v643 = vpop.f32.mrf.mxu0
        %v644 = vadd.f32 0.0, %v643
        %v645 = vpop.f32.mrf.mxu0
        %646 = vdwg.mxu0
        %v647 = vpack.c.bf16 %v641, %v641
        %v648 = vpack.c.bf16 %v644, %v644
        %650 = vrot.lane.b32.xlu0 %v647, 96
        %v651 = vpop.permute.xlu0 %650
        %vm652 = vcmask 64512
        %v654 = vsel %vm652, %v647, 0
        %v657 = vsel %vm652, %v651, 0
        %659 = vmatprep.subr.bf16.mxu0 0
        %660 = vmatpush1.bf16.xpose.msra.mxu0 0
        %661 = vmatprep.subr.bf16.mxu0 0
        %662 = vmatpush1.bf16.xpose.msra.mxu0 0
        %663 = vmatprep.subr.bf16.mxu0 0
        %664 = vmatpush1.bf16.xpose.msra.mxu0 0
        %665 = vmatprep.subr.bf16.mxu0 0
        %666 = vmatpush1.bf16.xpose.msra.mxu0 0
        %667 = vmatprep.subr.bf16.mxu0 0
        %668 = vmatpush1.bf16.xpose.msra.mxu0 0
        %669 = vmatprep.subr.bf16.mxu0 0
        %670 = vmatpush1.bf16.xpose.msra.mxu0 0
        %671 = vmatprep.subr.bf16.mxu0 0
        %672 = vmatpush1.bf16.xpose.msra.mxu0 0
        %673 = vmatprep.subr.bf16.mxu0 0
        %674 = vmatpush1.bf16.xpose.msra.mxu0 %v657
        %675 = vmatprep.subr.bf16.mxu0 0
        %676 = vmatpush2.bf16.xpose.msra.mxu0 0
        %677 = vmatprep.subr.bf16.mxu0 0
        %678 = vmatpush2.bf16.xpose.msra.mxu0 0
        %679 = vmatprep.subr.bf16.mxu0 0
        %680 = vmatpush2.bf16.xpose.msra.mxu0 0
        %681 = vmatprep.subr.bf16.mxu0 0
        %682 = vmatpush2.bf16.xpose.msra.mxu0 0
        %683 = vmatprep.subr.bf16.mxu0 0
        %684 = vmatpush2.bf16.xpose.msra.mxu0 0
        %685 = vmatprep.subr.bf16.mxu0 0
        %686 = vmatpush2.bf16.xpose.msra.mxu0 0
        %687 = vmatprep.subr.bf16.mxu0 0
        %688 = vmatpush2.bf16.xpose.msra.mxu0 0
        %689 = vmatprep.subr.bf16.mxu0 0
        %690 = vmatpush2.bf16.xpose.msra.mxu0 0
        %691 = vmatprep.mubr.bf16.mxu0 0
        %692 = vmatmul.mubr.bf16.gmra.mxu0 %v654
        %v693 = vpop.f32.mrf.mxu0
        %v694 = vadd.f32 0.0, %v693
        %v695 = vpop.f32.mrf.mxu0
        %v696 = vpop.f32.mrf.mxu0
        %v697 = vpop.f32.mrf.mxu0
        %698 = vdwg.mxu0
        %700 = vrot.lane.b32.xlu0 %v648, 96
        %v701 = vpop.permute.xlu0 %700
        %v703 = vsel %vm652, %v648, 0
        %v706 = vsel %vm652, %v701, 0
        %708 = vmatprep.subr.bf16.mxu0 0
        %709 = vmatpush1.bf16.xpose.msra.mxu0 0
        %710 = vmatprep.subr.bf16.mxu0 0
        %711 = vmatpush1.bf16.xpose.msra.mxu0 0
        %712 = vmatprep.subr.bf16.mxu0 0
        %713 = vmatpush1.bf16.xpose.msra.mxu0 0
        %714 = vmatprep.subr.bf16.mxu0 0
        %715 = vmatpush1.bf16.xpose.msra.mxu0 0
        %716 = vmatprep.subr.bf16.mxu0 0
        %717 = vmatpush1.bf16.xpose.msra.mxu0 0
        %718 = vmatprep.subr.bf16.mxu0 0
        %719 = vmatpush1.bf16.xpose.msra.mxu0 0
        %720 = vmatprep.subr.bf16.mxu0 0
        %721 = vmatpush1.bf16.xpose.msra.mxu0 0
        %722 = vmatprep.subr.bf16.mxu0 0
        %723 = vmatpush1.bf16.xpose.msra.mxu0 %v706
        %724 = vmatprep.subr.bf16.mxu0 0
        %725 = vmatpush2.bf16.xpose.msra.mxu0 0
        %726 = vmatprep.subr.bf16.mxu0 0
        %727 = vmatpush2.bf16.xpose.msra.mxu0 0
        %728 = vmatprep.subr.bf16.mxu0 0
        %729 = vmatpush2.bf16.xpose.msra.mxu0 0
        %730 = vmatprep.subr.bf16.mxu0 0
        %731 = vmatpush2.bf16.xpose.msra.mxu0 0
        %732 = vmatprep.subr.bf16.mxu0 0
        %733 = vmatpush2.bf16.xpose.msra.mxu0 0
        %734 = vmatprep.subr.bf16.mxu0 0
        %735 = vmatpush2.bf16.xpose.msra.mxu0 0
        %736 = vmatprep.subr.bf16.mxu0 0
        %737 = vmatpush2.bf16.xpose.msra.mxu0 0
        %738 = vmatprep.subr.bf16.mxu0 0
        %739 = vmatpush2.bf16.xpose.msra.mxu0 0
        %740 = vmatprep.mubr.bf16.mxu0 0
        %741 = vmatmul.mubr.bf16.gmra.mxu0 %v703
        %v742 = vpop.f32.mrf.mxu0
        %v743 = vadd.f32 0.0, %v742
        %v744 = vpop.f32.mrf.mxu0
        %v745 = vpop.f32.mrf.mxu0
        %v746 = vpop.f32.mrf.mxu0
        %747 = vdwg.mxu0
        %v748 = vsel %vm652, %v694, -inf
        %749 = vmax.xlane.f32.xlu0 %v748
        %v750 = vpop.xlane.xlu0 %749
        %v751 = vsel %vm652, %v743, -inf
        %752 = vmax.xlane.f32.xlu0 %v751
        %v753 = vpop.xlane.xlu0 %752
        %v754 = vsub.f32 %v694, %v750
        %v755 = vsub.f32 %v743, %v753
        %v756 = vmul.f32 %v754, 1.442695
        %v757 = vpow.pop %v756
        %v758 = vmul.f32 %v755, 1.442695
        %v759 = vpow.pop %v758
        %v760 = vsel %vm652, %v757, 0.0
        %761 = vadd.xlane.f32.xlu0 %v760
        %v762 = vpop.xlane.xlu0 %761
        %v763 = vsel %vm652, %v759, 0.0
        %764 = vadd.xlane.f32.xlu0 %v763
        %v765 = vpop.xlane.xlu0 %764
        %v766 = vrcp.pop %v762
        %v767 = vrcp.pop %v765
        %v768 = vmul.f32 %v757, %v766
        %v769 = vmul.f32 %v759, %v767
        %v770 = vpack.c.bf16 %v768, %v768
        %v771 = vpack.c.bf16 %v769, %v769
        %772 = vrot.lane.b32.xlu0 %v647, 64
        %v773 = vpop.permute.xlu0 %772
        %v775 = vsel %vm652, %v770, 0
        %vm777 = vcmask 1043456
        %v779 = vsel %vm777, %v773, 0
        %781 = vmatprep.subr.bf16.mxu0 0
        %782 = vmatpush1.bf16.msra.mxu0 0
        %783 = vmatprep.subr.bf16.mxu0 0
        %784 = vmatpush1.bf16.msra.mxu0 0
        %785 = vmatprep.subr.bf16.mxu0 0
        %786 = vmatpush1.bf16.msra.mxu0 0
        %787 = vmatprep.subr.bf16.mxu0 0
        %788 = vmatpush1.bf16.msra.mxu0 0
        %789 = vmatprep.subr.bf16.mxu0 0
        %790 = vmatpush1.bf16.msra.mxu0 0
        %791 = vmatprep.subr.bf16.mxu0 0
        %792 = vmatpush1.bf16.msra.mxu0 0
        %793 = vmatprep.subr.bf16.mxu0 0
        %794 = vmatpush1.bf16.msra.mxu0 0
        %795 = vmatprep.subr.bf16.mxu0 0
        %796 = vmatpush1.bf16.msra.mxu0 %v779
        %797 = vmatprep.subr.bf16.mxu0 0
        %798 = vmatpush2.bf16.msra.mxu0 0
        %799 = vmatprep.subr.bf16.mxu0 0
        %800 = vmatpush2.bf16.msra.mxu0 0
        %801 = vmatprep.subr.bf16.mxu0 0
        %802 = vmatpush2.bf16.msra.mxu0 0
        %803 = vmatprep.subr.bf16.mxu0 0
        %804 = vmatpush2.bf16.msra.mxu0 0
        %805 = vmatprep.subr.bf16.mxu0 0
        %806 = vmatpush2.bf16.msra.mxu0 0
        %807 = vmatprep.subr.bf16.mxu0 0
        %808 = vmatpush2.bf16.msra.mxu0 0
        %809 = vmatprep.subr.bf16.mxu0 0
        %810 = vmatpush2.bf16.msra.mxu0 0
        %811 = vmatprep.subr.bf16.mxu0 0
        %812 = vmatpush2.bf16.msra.mxu0 0
        %813 = vmatprep.mubr.bf16.mxu0 0
        %814 = vmatmul.mubr.bf16.gmra.mxu0 %v775
        %v815 = vpop.f32.mrf.mxu0
        %v816 = vadd.f32 0.0, %v815
        %v817 = vpop.f32.mrf.mxu0
        %v818 = vpop.f32.mrf.mxu0
        %v819 = vpop.f32.mrf.mxu0
        %820 = vdwg.mxu0
        %821 = vrot.lane.b32.xlu0 %v648, 64
        %v822 = vpop.permute.xlu0 %821
        %v824 = vsel %vm652, %v771, 0
        %v827 = vsel %vm777, %v822, 0
        %829 = vmatprep.subr.bf16.mxu0 0
        %830 = vmatpush1.bf16.msra.mxu0 0
        %831 = vmatprep.subr.bf16.mxu0 0
        %832 = vmatpush1.bf16.msra.mxu0 0
        %833 = vmatprep.subr.bf16.mxu0 0
        %834 = vmatpush1.bf16.msra.mxu0 0
        %835 = vmatprep.subr.bf16.mxu0 0
        %836 = vmatpush1.bf16.msra.mxu0 0
        %837 = vmatprep.subr.bf16.mxu0 0
        %838 = vmatpush1.bf16.msra.mxu0 0
        %839 = vmatprep.subr.bf16.mxu0 0
        %840 = vmatpush1.bf16.msra.mxu0 0
        %841 = vmatprep.subr.bf16.mxu0 0
        %842 = vmatpush1.bf16.msra.mxu0 0
        %843 = vmatprep.subr.bf16.mxu0 0
        %844 = vmatpush1.bf16.msra.mxu0 %v827
        %845 = vmatprep.subr.bf16.mxu0 0
        %846 = vmatpush2.bf16.msra.mxu0 0
        %847 = vmatprep.subr.bf16.mxu0 0
        %848 = vmatpush2.bf16.msra.mxu0 0
        %849 = vmatprep.subr.bf16.mxu0 0
        %850 = vmatpush2.bf16.msra.mxu0 0
        %851 = vmatprep.subr.bf16.mxu0 0
        %852 = vmatpush2.bf16.msra.mxu0 0
        %853 = vmatprep.subr.bf16.mxu0 0
        %854 = vmatpush2.bf16.msra.mxu0 0
        %855 = vmatprep.subr.bf16.mxu0 0
        %856 = vmatpush2.bf16.msra.mxu0 0
        %857 = vmatprep.subr.bf16.mxu0 0
        %858 = vmatpush2.bf16.msra.mxu0 0
        %859 = vmatprep.subr.bf16.mxu0 0
        %860 = vmatpush2.bf16.msra.mxu0 0
        %861 = vmatprep.mubr.bf16.mxu0 0
        %862 = vmatmul.mubr.bf16.gmra.mxu0 %v824
        %v863 = vpop.f32.mrf.mxu0
        %v864 = vadd.f32 0.0, %v863
        %v865 = vpop.f32.mrf.mxu0
        %v866 = vpop.f32.mrf.mxu0
        %v867 = vpop.f32.mrf.mxu0
        %868 = vdwg.mxu0
        %v869 = vpack.c.bf16 %v864, %v816
        %v871 = vunpack.c.l.b16 %v869
        %v872 = vunpack.c.h.b16 %v869
        %v873 = vpack.c.b16 %v871, %v871
        %v874 = vpack.c.b16 %v872, %v872
        %vm877 = vcmask 60416
        %878 = vst.msk [vmem:[#allocation3] sm:$0xf] %vm877, %v873
        %879 = vst.msk [vmem:[#allocation3 + $0x4] sm:$0xf] %vm877, %v874
        %880 = vrot.lane.b32.xlu0 %v647, 120
        %v881 = vpop.permute.xlu0 %880
        %882 = vrot.lane.b32.xlu0 %v647, 88
        %v883 = vpop.permute.xlu0 %882
        %v885 = vsel %vm652, %v881, 0
        %v888 = vsel %vm652, %v883, 0
        %890 = vmatprep.subr.bf16.mxu0 0
        %891 = vmatpush1.bf16.xpose.msra.mxu0 0
        %892 = vmatprep.subr.bf16.mxu0 0
        %893 = vmatpush1.bf16.xpose.msra.mxu0 0
        %894 = vmatprep.subr.bf16.mxu0 0
        %895 = vmatpush1.bf16.xpose.msra.mxu0 0
        %896 = vmatprep.subr.bf16.mxu0 0
        %897 = vmatpush1.bf16.xpose.msra.mxu0 0
        %898 = vmatprep.subr.bf16.mxu0 0
        %899 = vmatpush1.bf16.xpose.msra.mxu0 0
        %900 = vmatprep.subr.bf16.mxu0 0
        %901 = vmatpush1.bf16.xpose.msra.mxu0 0
        %902 = vmatprep.subr.bf16.mxu0 0
        %903 = vmatpush1.bf16.xpose.msra.mxu0 0
        %904 = vmatprep.subr.bf16.mxu0 0
        %905 = vmatpush1.bf16.xpose.msra.mxu0 %v888
        %906 = vmatprep.subr.bf16.mxu0 0
        %907 = vmatpush2.bf16.xpose.msra.mxu0 0
        %908 = vmatprep.subr.bf16.mxu0 0
        %909 = vmatpush2.bf16.xpose.msra.mxu0 0
        %910 = vmatprep.subr.bf16.mxu0 0
        %911 = vmatpush2.bf16.xpose.msra.mxu0 0
        %912 = vmatprep.subr.bf16.mxu0 0
        %913 = vmatpush2.bf16.xpose.msra.mxu0 0
        %914 = vmatprep.subr.bf16.mxu0 0
        %915 = vmatpush2.bf16.xpose.msra.mxu0 0
        %916 = vmatprep.subr.bf16.mxu0 0
        %917 = vmatpush2.bf16.xpose.msra.mxu0 0
        %918 = vmatprep.subr.bf16.mxu0 0
        %919 = vmatpush2.bf16.xpose.msra.mxu0 0
        %920 = vmatprep.subr.bf16.mxu0 0
        %921 = vmatpush2.bf16.xpose.msra.mxu0 0
        %922 = vmatprep.mubr.bf16.mxu0 0
        %923 = vmatmul.mubr.bf16.gmra.mxu0 %v885
        %v924 = vpop.f32.mrf.mxu0
        %v925 = vadd.f32 0.0, %v924
        %v926 = vpop.f32.mrf.mxu0
        %v927 = vpop.f32.mrf.mxu0
        %v928 = vpop.f32.mrf.mxu0
        %929 = vdwg.mxu0
        %930 = vrot.lane.b32.xlu0 %v648, 120
        %v931 = vpop.permute.xlu0 %930
        %932 = vrot.lane.b32.xlu0 %v648, 88
        %v933 = vpop.permute.xlu0 %932
        %v935 = vsel %vm652, %v931, 0
        %v938 = vsel %vm652, %v933, 0
        %940 = vmatprep.subr.bf16.mxu0 0
        %941 = vmatpush1.bf16.xpose.msra.mxu0 0
        %942 = vmatprep.subr.bf16.mxu0 0
        %943 = vmatpush1.bf16.xpose.msra.mxu0 0
        %944 = vmatprep.subr.bf16.mxu0 0
        %945 = vmatpush1.bf16.xpose.msra.mxu0 0
        %946 = vmatprep.subr.bf16.mxu0 0
        %947 = vmatpush1.bf16.xpose.msra.mxu0 0
        %948 = vmatprep.subr.bf16.mxu0 0
        %949 = vmatpush1.bf16.xpose.msra.mxu0 0
        %950 = vmatprep.subr.bf16.mxu0 0
        %951 = vmatpush1.bf16.xpose.msra.mxu0 0
        %952 = vmatprep.subr.bf16.mxu0 0
        %953 = vmatpush1.bf16.xpose.msra.mxu0 0
        %954 = vmatprep.subr.bf16.mxu0 0
        %955 = vmatpush1.bf16.xpose.msra.mxu0 %v938
        %956 = vmatprep.subr.bf16.mxu0 0
        %957 = vmatpush2.bf16.xpose.msra.mxu0 0
        %958 = vmatprep.subr.bf16.mxu0 0
        %959 = vmatpush2.bf16.xpose.msra.mxu0 0
        %960 = vmatprep.subr.bf16.mxu0 0
        %961 = vmatpush2.bf16.xpose.msra.mxu0 0
        %962 = vmatprep.subr.bf16.mxu0 0
        %963 = vmatpush2.bf16.xpose.msra.mxu0 0
        %964 = vmatprep.subr.bf16.mxu0 0
        %965 = vmatpush2.bf16.xpose.msra.mxu0 0
        %966 = vmatprep.subr.bf16.mxu0 0
        %967 = vmatpush2.bf16.xpose.msra.mxu0 0
        %968 = vmatprep.subr.bf16.mxu0 0
        %969 = vmatpush2.bf16.xpose.msra.mxu0 0
        %970 = vmatprep.subr.bf16.mxu0 0
        %971 = vmatpush2.bf16.xpose.msra.mxu0 0
        %972 = vmatprep.mubr.bf16.mxu0 0
        %973 = vmatmul.mubr.bf16.gmra.mxu0 %v935
        %v974 = vpop.f32.mrf.mxu0
        %v975 = vadd.f32 0.0, %v974
        %v976 = vpop.f32.mrf.mxu0
        %v977 = vpop.f32.mrf.mxu0
        %v978 = vpop.f32.mrf.mxu0
        %979 = vdwg.mxu0
        %v980 = vsel %vm652, %v925, -inf
        %981 = vmax.xlane.f32.xlu0 %v980
        %v982 = vpop.xlane.xlu0 %981
        %v983 = vsel %vm652, %v975, -inf
        %984 = vmax.xlane.f32.xlu0 %v983
        %v985 = vpop.xlane.xlu0 %984
        %v986 = vsub.f32 %v925, %v982
        %v987 = vsub.f32 %v975, %v985
        %v988 = vmul.f32 %v986, 1.442695
        %v989 = vpow.pop %v988
        %v990 = vmul.f32 %v987, 1.442695
        %v991 = vpow.pop %v990
        %v992 = vsel %vm652, %v989, 0.0
        %993 = vadd.xlane.f32.xlu0 %v992
        %v994 = vpop.xlane.xlu0 %993
        %v995 = vsel %vm652, %v991, 0.0
        %996 = vadd.xlane.f32.xlu0 %v995
        %v997 = vpop.xlane.xlu0 %996
        %v998 = vrcp.pop %v994
        %v999 = vrcp.pop %v997
        %v1000 = vmul.f32 %v989, %v998
        %v1001 = vmul.f32 %v991, %v999
        %v1002 = vpack.c.bf16 %v1000, %v1000
        %v1003 = vpack.c.bf16 %v1001, %v1001
        %1004 = vrot.lane.b32.xlu0 %v647, 56
        %v1005 = vpop.permute.xlu0 %1004
        %v1007 = vsel %vm652, %v1002, 0
        %v1010 = vsel %vm777, %v1005, 0
        %1012 = vmatprep.subr.bf16.mxu0 0
        %1013 = vmatpush1.bf16.msra.mxu0 0
        %1014 = vmatprep.subr.bf16.mxu0 0
        %1015 = vmatpush1.bf16.msra.mxu0 0
        %1016 = vmatprep.subr.bf16.mxu0 0
        %1017 = vmatpush1.bf16.msra.mxu0 0
        %1018 = vmatprep.subr.bf16.mxu0 0
        %1019 = vmatpush1.bf16.msra.mxu0 0
        %1020 = vmatprep.subr.bf16.mxu0 0
        %1021 = vmatpush1.bf16.msra.mxu0 0
        %1022 = vmatprep.subr.bf16.mxu0 0
        %1023 = vmatpush1.bf16.msra.mxu0 0
        %1024 = vmatprep.subr.bf16.mxu0 0
        %1025 = vmatpush1.bf16.msra.mxu0 0
        %1026 = vmatprep.subr.bf16.mxu0 0
        %1027 = vmatpush1.bf16.msra.mxu0 %v1010
        %1028 = vmatprep.subr.bf16.mxu0 0
        %1029 = vmatpush2.bf16.msra.mxu0 0
        %1030 = vmatprep.subr.bf16.mxu0 0
        %1031 = vmatpush2.bf16.msra.mxu0 0
        %1032 = vmatprep.subr.bf16.mxu0 0
        %1033 = vmatpush2.bf16.msra.mxu0 0
        %1034 = vmatprep.subr.bf16.mxu0 0
        %1035 = vmatpush2.bf16.msra.mxu0 0
        %1036 = vmatprep.subr.bf16.mxu0 0
        %1037 = vmatpush2.bf16.msra.mxu0 0
        %1038 = vmatprep.subr.bf16.mxu0 0
        %1039 = vmatpush2.bf16.msra.mxu0 0
        %1040 = vmatprep.subr.bf16.mxu0 0
        %1041 = vmatpush2.bf16.msra.mxu0 0
        %1042 = vmatprep.subr.bf16.mxu0 0
        %1043 = vmatpush2.bf16.msra.mxu0 0
        %1044 = vmatprep.mubr.bf16.mxu0 0
        %1045 = vmatmul.mubr.bf16.gmra.mxu0 %v1007
        %v1046 = vpop.f32.mrf.mxu0
        %v1047 = vadd.f32 0.0, %v1046
        %v1048 = vpop.f32.mrf.mxu0
        %v1049 = vpop.f32.mrf.mxu0
        %v1050 = vpop.f32.mrf.mxu0
        %1051 = vdwg.mxu0
        %1052 = vrot.lane.b32.xlu0 %v648, 56
        %v1053 = vpop.permute.xlu0 %1052
        %v1055 = vsel %vm652, %v1003, 0
        %v1058 = vsel %vm777, %v1053, 0
        %1060 = vmatprep.subr.bf16.mxu0 0
        %1061 = vmatpush1.bf16.msra.mxu0 0
        %1062 = vmatprep.subr.bf16.mxu0 0
        %1063 = vmatpush1.bf16.msra.mxu0 0
        %1064 = vmatprep.subr.bf16.mxu0 0
        %1065 = vmatpush1.bf16.msra.mxu0 0
        %1066 = vmatprep.subr.bf16.mxu0 0
        %1067 = vmatpush1.bf16.msra.mxu0 0
        %1068 = vmatprep.subr.bf16.mxu0 0
        %1069 = vmatpush1.bf16.msra.mxu0 0
        %1070 = vmatprep.subr.bf16.mxu0 0
        %1071 = vmatpush1.bf16.msra.mxu0 0
        %1072 = vmatprep.subr.bf16.mxu0 0
        %1073 = vmatpush1.bf16.msra.mxu0 0
        %1074 = vmatprep.subr.bf16.mxu0 0
        %1075 = vmatpush1.bf16.msra.mxu0 %v1058
        %1076 = vmatprep.subr.bf16.mxu0 0
        %1077 = vmatpush2.bf16.msra.mxu0 0
        %1078 = vmatprep.subr.bf16.mxu0 0
        %1079 = vmatpush2.bf16.msra.mxu0 0
        %1080 = vmatprep.subr.bf16.mxu0 0
        %1081 = vmatpush2.bf16.msra.mxu0 0
        %1082 = vmatprep.subr.bf16.mxu0 0
        %1083 = vmatpush2.bf16.msra.mxu0 0
        %1084 = vmatprep.subr.bf16.mxu0 0
        %1085 = vmatpush2.bf16.msra.mxu0 0
        %1086 = vmatprep.subr.bf16.mxu0 0
        %1087 = vmatpush2.bf16.msra.mxu0 0
        %1088 = vmatprep.subr.bf16.mxu0 0
        %1089 = vmatpush2.bf16.msra.mxu0 0
        %1090 = vmatprep.subr.bf16.mxu0 0
        %1091 = vmatpush2.bf16.msra.mxu0 0
        %1092 = vmatprep.mubr.bf16.mxu0 0
        %1093 = vmatmul.mubr.bf16.gmra.mxu0 %v1055
        %v1094 = vpop.f32.mrf.mxu0
        %v1095 = vadd.f32 0.0, %v1094
        %v1096 = vpop.f32.mrf.mxu0
        %v1097 = vpop.f32.mrf.mxu0
        %v1098 = vpop.f32.mrf.mxu0
        %1099 = vdwg.mxu0
        %v1100 = vpack.c.bf16 %v1095, %v1047
        %v1102 = vunpack.c.l.b16 %v1100
        %v1103 = vunpack.c.h.b16 %v1100
        %v1104 = vpack.c.b16 %v1102, %v1102
        %v1105 = vpack.c.b16 %v1103, %v1103
        %1106 = vrot.lane.b32.xlu0 %v1104, 8
        %v1107 = vpop.permute.xlu0 %1106
        %1108 = vrot.lane.b32.xlu0 %v1105, 8
        %v1109 = vpop.permute.xlu0 %1108
        %vm1112 = vcmask 126016
        %1113 = vst.msk [vmem:[#allocation3] sm:$0xf] %vm1112, %v1107
        %1114 = vst.msk [vmem:[#allocation3 + $0x4] sm:$0xf] %vm1112, %v1109
        %1115 = vrot.lane.b32.xlu0 %v647, 112
        %v1116 = vpop.permute.xlu0 %1115
        %1117 = vrot.lane.b32.xlu0 %v647, 80
        %v1118 = vpop.permute.xlu0 %1117
        %v1120 = vsel %vm652, %v1116, 0
        %v1123 = vsel %vm652, %v1118, 0
        %1125 = vmatprep.subr.bf16.mxu0 0
        %1126 = vmatpush1.bf16.xpose.msra.mxu0 0
        %1127 = vmatprep.subr.bf16.mxu0 0
        %1128 = vmatpush1.bf16.xpose.msra.mxu0 0
        %1129 = vmatprep.subr.bf16.mxu0 0
        %1130 = vmatpush1.bf16.xpose.msra.mxu0 0
        %1131 = vmatprep.subr.bf16.mxu0 0
        %1132 = vmatpush1.bf16.xpose.msra.mxu0 0
        %1133 = vmatprep.subr.bf16.mxu0 0
        %1134 = vmatpush1.bf16.xpose.msra.mxu0 0
        %1135 = vmatprep.subr.bf16.mxu0 0
        %1136 = vmatpush1.bf16.xpose.msra.mxu0 0
        %1137 = vmatprep.subr.bf16.mxu0 0
        %1138 = vmatpush1.bf16.xpose.msra.mxu0 0
        %1139 = vmatprep.subr.bf16.mxu0 0
        %1140 = vmatpush1.bf16.xpose.msra.mxu0 %v1123
        %1141 = vmatprep.subr.bf16.mxu0 0
        %1142 = vmatpush2.bf16.xpose.msra.mxu0 0
        %1143 = vmatprep.subr.bf16.mxu0 0
        %1144 = vmatpush2.bf16.xpose.msra.mxu0 0
        %1145 = vmatprep.subr.bf16.mxu0 0
        %1146 = vmatpush2.bf16.xpose.msra.mxu0 0
        %1147 = vmatprep.subr.bf16.mxu0 0
        %1148 = vmatpush2.bf16.xpose.msra.mxu0 0
        %1149 = vmatprep.subr.bf16.mxu0 0
        %1150 = vmatpush2.bf16.xpose.msra.mxu0 0
        %1151 = vmatprep.subr.bf16.mxu0 0
        %1152 = vmatpush2.bf16.xpose.msra.mxu0 0
        %1153 = vmatprep.subr.bf16.mxu0 0
        %1154 = vmatpush2.bf16.xpose.msra.mxu0 0
        %1155 = vmatprep.subr.bf16.mxu0 0
        %1156 = vmatpush2.bf16.xpose.msra.mxu0 0
        %1157 = vmatprep.mubr.bf16.mxu0 0
        %1158 = vmatmul.mubr.bf16.gmra.mxu0 %v1120
        %v1159 = vpop.f32.mrf.mxu0
        %v1160 = vadd.f32 0.0, %v1159
        %v1161 = vpop.f32.mrf.mxu0
        %v1162 = vpop.f32.mrf.mxu0
        %v1163 = vpop.f32.mrf.mxu0
        %1164 = vdwg.mxu0
        %1165 = vrot.lane.b32.xlu0 %v648, 112
        %v1166 = vpop.permute.xlu0 %1165
        %1167 = vrot.lane.b32.xlu0 %v648, 80
        %v1168 = vpop.permute.xlu0 %1167
        %v1170 = vsel %vm652, %v1166, 0
        %v1173 = vsel %vm652, %v1168, 0
        %1175 = vmatprep.subr.bf16.mxu0 0
        %1176 = vmatpush1.bf16.xpose.msra.mxu0 0
        %1177 = vmatprep.subr.bf16.mxu0 0
        %1178 = vmatpush1.bf16.xpose.msra.mxu0 0
        %1179 = vmatprep.subr.bf16.mxu0 0
        %1180 = vmatpush1.bf16.xpose.msra.mxu0 0
        %1181 = vmatprep.subr.bf16.mxu0 0
        %1182 = vmatpush1.bf16.xpose.msra.mxu0 0
        %1183 = vmatprep.subr.bf16.mxu0 0
        %1184 = vmatpush1.bf16.xpose.msra.mxu0 0
        %1185 = vmatprep.subr.bf16.mxu0 0
        %1186 = vmatpush1.bf16.xpose.msra.mxu0 0
        %1187 = vmatprep.subr.bf16.mxu0 0
        %1188 = vmatpush1.bf16.xpose.msra.mxu0 0
        %1189 = vmatprep.subr.bf16.mxu0 0
        %1190 = vmatpush1.bf16.xpose.msra.mxu0 %v1173
        %1191 = vmatprep.subr.bf16.mxu0 0
        %1192 = vmatpush2.bf16.xpose.msra.mxu0 0
        %1193 = vmatprep.subr.bf16.mxu0 0
        %1194 = vmatpush2.bf16.xpose.msra.mxu0 0
        %1195 = vmatprep.subr.bf16.mxu0 0
        %1196 = vmatpush2.bf16.xpose.msra.mxu0 0
        %1197 = vmatprep.subr.bf16.mxu0 0
        %1198 = vmatpush2.bf16.xpose.msra.mxu0 0
        %1199 = vmatprep.subr.bf16.mxu0 0
        %1200 = vmatpush2.bf16.xpose.msra.mxu0 0
        %1201 = vmatprep.subr.bf16.mxu0 0
        %1202 = vmatpush2.bf16.xpose.msra.mxu0 0
        %1203 = vmatprep.subr.bf16.mxu0 0
        %1204 = vmatpush2.bf16.xpose.msra.mxu0 0
        %1205 = vmatprep.subr.bf16.mxu0 0
        %1206 = vmatpush2.bf16.xpose.msra.mxu0 0
        %1207 = vmatprep.mubr.bf16.mxu0 0
        %1208 = vmatmul.mubr.bf16.gmra.mxu0 %v1170
        %v1209 = vpop.f32.mrf.mxu0
        %v1210 = vadd.f32 0.0, %v1209
        %v1211 = vpop.f32.mrf.mxu0
        %v1212 = vpop.f32.mrf.mxu0
        %v1213 = vpop.f32.mrf.mxu0
        %1214 = vdwg.mxu0
        %v1215 = vsel %vm652, %v1160, -inf
        %1216 = vmax.xlane.f32.xlu0 %v1215
        %v1217 = vpop.xlane.xlu0 %1216
        %v1218 = vsel %vm652, %v1210, -inf
        %1219 = vmax.xlane.f32.xlu0 %v1218
        %v1220 = vpop.xlane.xlu0 %1219
        %v1221 = vsub.f32 %v1160, %v1217
        %v1222 = vsub.f32 %v1210, %v1220
        %v1223 = vmul.f32 %v1221, 1.442695
        %v1224 = vpow.pop %v1223
        %v1225 = vmul.f32 %v1222, 1.442695
        %v1226 = vpow.pop %v1225
        %v1227 = vsel %vm652, %v1224, 0.0
        %1228 = vadd.xlane.f32.xlu0 %v1227
        %v1229 = vpop.xlane.xlu0 %1228
        %v1230 = vsel %vm652, %v1226, 0.0
        %1231 = vadd.xlane.f32.xlu0 %v1230
        %v1232 = vpop.xlane.xlu0 %1231
        %v1233 = vrcp.pop %v1229
        %v1234 = vrcp.pop %v1232
        %v1235 = vmul.f32 %v1224, %v1233
        %v1236 = vmul.f32 %v1226, %v1234
        %v1237 = vpack.c.bf16 %v1235, %v1235
        %v1238 = vpack.c.bf16 %v1236, %v1236
        %1239 = vrot.lane.b32.xlu0 %v647, 48
        %v1240 = vpop.permute.xlu0 %1239
        %v1242 = vsel %vm652, %v1237, 0
        %v1245 = vsel %vm777, %v1240, 0
        %1247 = vmatprep.subr.bf16.mxu0 0
        %1248 = vmatpush1.bf16.msra.mxu0 0
        %1249 = vmatprep.subr.bf16.mxu0 0
        %1250 = vmatpush1.bf16.msra.mxu0 0
        %1251 = vmatprep.subr.bf16.mxu0 0
        %1252 = vmatpush1.bf16.msra.mxu0 0
        %1253 = vmatprep.subr.bf16.mxu0 0
        %1254 = vmatpush1.bf16.msra.mxu0 0
        %1255 = vmatprep.subr.bf16.mxu0 0
        %1256 = vmatpush1.bf16.msra.mxu0 0
        %1257 = vmatprep.subr.bf16.mxu0 0
        %1258 = vmatpush1.bf16.msra.mxu0 0
        %1259 = vmatprep.subr.bf16.mxu0 0
        %1260 = vmatpush1.bf16.msra.mxu0 0
        %1261 = vmatprep.subr.bf16.mxu0 0
        %1262 = vmatpush1.bf16.msra.mxu0 %v1245
        %1263 = vmatprep.subr.bf16.mxu0 0
        %1264 = vmatpush2.bf16.msra.mxu0 0
        %1265 = vmatprep.subr.bf16.mxu0 0
        %1266 = vmatpush2.bf16.msra.mxu0 0
        %1267 = vmatprep.subr.bf16.mxu0 0
        %1268 = vmatpush2.bf16.msra.mxu0 0
        %1269 = vmatprep.subr.bf16.mxu0 0
        %1270 = vmatpush2.bf16.msra.mxu0 0
        %1271 = vmatprep.subr.bf16.mxu0 0
        %1272 = vmatpush2.bf16.msra.mxu0 0
        %1273 = vmatprep.subr.bf16.mxu0 0
        %1274 = vmatpush2.bf16.msra.mxu0 0
        %1275 = vmatprep.subr.bf16.mxu0 0
        %1276 = vmatpush2.bf16.msra.mxu0 0
        %1277 = vmatprep.subr.bf16.mxu0 0
        %1278 = vmatpush2.bf16.msra.mxu0 0
        %1279 = vmatprep.mubr.bf16.mxu0 0
        %1280 = vmatmul.mubr.bf16.gmra.mxu0 %v1242
        %v1281 = vpop.f32.mrf.mxu0
        %v1282 = vadd.f32 0.0, %v1281
        %v1283 = vpop.f32.mrf.mxu0
        %v1284 = vpop.f32.mrf.mxu0
        %v1285 = vpop.f32.mrf.mxu0
        %1286 = vdwg.mxu0
        %1287 = vrot.lane.b32.xlu0 %v648, 48
        %v1288 = vpop.permute.xlu0 %1287
        %v1290 = vsel %vm652, %v1238, 0
        %v1293 = vsel %vm777, %v1288, 0
        %1295 = vmatprep.subr.bf16.mxu0 0
        %1296 = vmatpush1.bf16.msra.mxu0 0
        %1297 = vmatprep.subr.bf16.mxu0 0
        %1298 = vmatpush1.bf16.msra.mxu0 0
        %1299 = vmatprep.subr.bf16.mxu0 0
        %1300 = vmatpush1.bf16.msra.mxu0 0
        %1301 = vmatprep.subr.bf16.mxu0 0
        %1302 = vmatpush1.bf16.msra.mxu0 0
        %1303 = vmatprep.subr.bf16.mxu0 0
        %1304 = vmatpush1.bf16.msra.mxu0 0
        %1305 = vmatprep.subr.bf16.mxu0 0
        %1306 = vmatpush1.bf16.msra.mxu0 0
        %1307 = vmatprep.subr.bf16.mxu0 0
        %1308 = vmatpush1.bf16.msra.mxu0 0
        %1309 = vmatprep.subr.bf16.mxu0 0
        %1310 = vmatpush1.bf16.msra.mxu0 %v1293
        %1311 = vmatprep.subr.bf16.mxu0 0
        %1312 = vmatpush2.bf16.msra.mxu0 0
        %1313 = vmatprep.subr.bf16.mxu0 0
        %1314 = vmatpush2.bf16.msra.mxu0 0
        %1315 = vmatprep.subr.bf16.mxu0 0
        %1316 = vmatpush2.bf16.msra.mxu0 0
        %1317 = vmatprep.subr.bf16.mxu0 0
        %1318 = vmatpush2.bf16.msra.mxu0 0
        %1319 = vmatprep.subr.bf16.mxu0 0
        %1320 = vmatpush2.bf16.msra.mxu0 0
        %1321 = vmatprep.subr.bf16.mxu0 0
        %1322 = vmatpush2.bf16.msra.mxu0 0
        %1323 = vmatprep.subr.bf16.mxu0 0
        %1324 = vmatpush2.bf16.msra.mxu0 0
        %1325 = vmatprep.subr.bf16.mxu0 0
        %1326 = vmatpush2.bf16.msra.mxu0 0
        %1327 = vmatprep.mubr.bf16.mxu0 0
        %1328 = vmatmul.mubr.bf16.gmra.mxu0 %v1290
        %v1329 = vpop.f32.mrf.mxu0
        %v1330 = vadd.f32 0.0, %v1329
        %v1331 = vpop.f32.mrf.mxu0
        %v1332 = vpop.f32.mrf.mxu0
        %v1333 = vpop.f32.mrf.mxu0
        %1334 = vdwg.mxu0
        %v1335 = vpack.c.bf16 %v1330, %v1282
        %v1337 = vunpack.c.l.b16 %v1335
        %v1338 = vunpack.c.h.b16 %v1335
        %v1339 = vpack.c.b16 %v1337, %v1337
        %v1340 = vpack.c.b16 %v1338, %v1338
        %1341 = vrot.lane.b32.xlu0 %v1339, 16
        %v1342 = vpop.permute.xlu0 %1341
        %1343 = vrot.lane.b32.xlu0 %v1340, 16
        %v1344 = vpop.permute.xlu0 %1343
        %vm1347 = vcmask 191616
        %1348 = vst.msk [vmem:[#allocation3] sm:$0xf] %vm1347, %v1342
        %1349 = vst.msk [vmem:[#allocation3 + $0x4] sm:$0xf] %vm1347, %v1344
        %1350 = vrot.lane.b32.xlu0 %v647, 104
        %v1351 = vpop.permute.xlu0 %1350
        %1352 = vrot.lane.b32.xlu0 %v647, 72
        %v1353 = vpop.permute.xlu0 %1352
        %v1355 = vsel %vm652, %v1351, 0
        %v1358 = vsel %vm652, %v1353, 0
        %1360 = vmatprep.subr.bf16.mxu0 0
        %1361 = vmatpush1.bf16.xpose.msra.mxu0 0
        %1362 = vmatprep.subr.bf16.mxu0 0
        %1363 = vmatpush1.bf16.xpose.msra.mxu0 0
        %1364 = vmatprep.subr.bf16.mxu0 0
        %1365 = vmatpush1.bf16.xpose.msra.mxu0 0
        %1366 = vmatprep.subr.bf16.mxu0 0
        %1367 = vmatpush1.bf16.xpose.msra.mxu0 0
        %1368 = vmatprep.subr.bf16.mxu0 0
        %1369 = vmatpush1.bf16.xpose.msra.mxu0 0
        %1370 = vmatprep.subr.bf16.mxu0 0
        %1371 = vmatpush1.bf16.xpose.msra.mxu0 0
        %1372 = vmatprep.subr.bf16.mxu0 0
        %1373 = vmatpush1.bf16.xpose.msra.mxu0 0
        %1374 = vmatprep.subr.bf16.mxu0 0
        %1375 = vmatpush1.bf16.xpose.msra.mxu0 %v1358
        %1376 = vmatprep.subr.bf16.mxu0 0
        %1377 = vmatpush2.bf16.xpose.msra.mxu0 0
        %1378 = vmatprep.subr.bf16.mxu0 0
        %1379 = vmatpush2.bf16.xpose.msra.mxu0 0
        %1380 = vmatprep.subr.bf16.mxu0 0
        %1381 = vmatpush2.bf16.xpose.msra.mxu0 0
        %1382 = vmatprep.subr.bf16.mxu0 0
        %1383 = vmatpush2.bf16.xpose.msra.mxu0 0
        %1384 = vmatprep.subr.bf16.mxu0 0
        %1385 = vmatpush2.bf16.xpose.msra.mxu0 0
        %1386 = vmatprep.subr.bf16.mxu0 0
        %1387 = vmatpush2.bf16.xpose.msra.mxu0 0
        %1388 = vmatprep.subr.bf16.mxu0 0
        %1389 = vmatpush2.bf16.xpose.msra.mxu0 0
        %1390 = vmatprep.subr.bf16.mxu0 0
        %1391 = vmatpush2.bf16.xpose.msra.mxu0 0
        %1392 = vmatprep.mubr.bf16.mxu0 0
        %1393 = vmatmul.mubr.bf16.gmra.mxu0 %v1355
        %v1394 = vpop.f32.mrf.mxu0
        %v1395 = vadd.f32 0.0, %v1394
        %v1396 = vpop.f32.mrf.mxu0
        %v1397 = vpop.f32.mrf.mxu0
        %v1398 = vpop.f32.mrf.mxu0
        %1399 = vdwg.mxu0
        %1400 = vrot.lane.b32.xlu0 %v648, 104
        %v1401 = vpop.permute.xlu0 %1400
        %1402 = vrot.lane.b32.xlu0 %v648, 72
        %v1403 = vpop.permute.xlu0 %1402
        %v1405 = vsel %vm652, %v1401, 0
        %v1408 = vsel %vm652, %v1403, 0
        %1410 = vmatprep.subr.bf16.mxu0 0
        %1411 = vmatpush1.bf16.xpose.msra.mxu0 0
        %1412 = vmatprep.subr.bf16.mxu0 0
        %1413 = vmatpush1.bf16.xpose.msra.mxu0 0
        %1414 = vmatprep.subr.bf16.mxu0 0
        %1415 = vmatpush1.bf16.xpose.msra.mxu0 0
        %1416 = vmatprep.subr.bf16.mxu0 0
        %1417 = vmatpush1.bf16.xpose.msra.mxu0 0
        %1418 = vmatprep.subr.bf16.mxu0 0
        %1419 = vmatpush1.bf16.xpose.msra.mxu0 0
        %1420 = vmatprep.subr.bf16.mxu0 0
        %1421 = vmatpush1.bf16.xpose.msra.mxu0 0
        %1422 = vmatprep.subr.bf16.mxu0 0
        %1423 = vmatpush1.bf16.xpose.msra.mxu0 0
        %1424 = vmatprep.subr.bf16.mxu0 0
        %1425 = vmatpush1.bf16.xpose.msra.mxu0 %v1408
        %1426 = vmatprep.subr.bf16.mxu0 0
        %1427 = vmatpush2.bf16.xpose.msra.mxu0 0
        %1428 = vmatprep.subr.bf16.mxu0 0
        %1429 = vmatpush2.bf16.xpose.msra.mxu0 0
        %1430 = vmatprep.subr.bf16.mxu0 0
        %1431 = vmatpush2.bf16.xpose.msra.mxu0 0
        %1432 = vmatprep.subr.bf16.mxu0 0
        %1433 = vmatpush2.bf16.xpose.msra.mxu0 0
        %1434 = vmatprep.subr.bf16.mxu0 0
        %1435 = vmatpush2.bf16.xpose.msra.mxu0 0
        %1436 = vmatprep.subr.bf16.mxu0 0
        %1437 = vmatpush2.bf16.xpose.msra.mxu0 0
        %1438 = vmatprep.subr.bf16.mxu0 0
        %1439 = vmatpush2.bf16.xpose.msra.mxu0 0
        %1440 = vmatprep.subr.bf16.mxu0 0
        %1441 = vmatpush2.bf16.xpose.msra.mxu0 0
        %1442 = vmatprep.mubr.bf16.mxu0 0
        %1443 = vmatmul.mubr.bf16.gmra.mxu0 %v1405
        %v1444 = vpop.f32.mrf.mxu0
        %v1445 = vadd.f32 0.0, %v1444
        %v1446 = vpop.f32.mrf.mxu0
        %v1447 = vpop.f32.mrf.mxu0
        %v1448 = vpop.f32.mrf.mxu0
        %1449 = vdwg.mxu0
        %v1450 = vsel %vm652, %v1395, -inf
        %1451 = vmax.xlane.f32.xlu0 %v1450
        %v1452 = vpop.xlane.xlu0 %1451
        %v1453 = vsel %vm652, %v1445, -inf
        %1454 = vmax.xlane.f32.xlu0 %v1453
        %v1455 = vpop.xlane.xlu0 %1454
        %v1456 = vsub.f32 %v1395, %v1452
        %v1457 = vsub.f32 %v1445, %v1455
        %v1458 = vmul.f32 %v1456, 1.442695
        %v1459 = vpow.pop %v1458
        %v1460 = vmul.f32 %v1457, 1.442695
        %v1461 = vpow.pop %v1460
        %v1462 = vsel %vm652, %v1459, 0.0
        %1463 = vadd.xlane.f32.xlu0 %v1462
        %v1464 = vpop.xlane.xlu0 %1463
        %v1465 = vsel %vm652, %v1461, 0.0
        %1466 = vadd.xlane.f32.xlu0 %v1465
        %v1467 = vpop.xlane.xlu0 %1466
        %v1468 = vrcp.pop %v1464
        %v1469 = vrcp.pop %v1467
        %v1470 = vmul.f32 %v1459, %v1468
        %v1471 = vmul.f32 %v1461, %v1469
        %v1472 = vpack.c.bf16 %v1470, %v1470
        %v1473 = vpack.c.bf16 %v1471, %v1471
        %1474 = vrot.lane.b32.xlu0 %v647, 40
        %v1475 = vpop.permute.xlu0 %1474
        %v1477 = vsel %vm652, %v1472, 0
        %v1480 = vsel %vm777, %v1475, 0
        %1482 = vmatprep.subr.bf16.mxu0 0
        %1483 = vmatpush1.bf16.msra.mxu0 0
        %1484 = vmatprep.subr.bf16.mxu0 0
        %1485 = vmatpush1.bf16.msra.mxu0 0
        %1486 = vmatprep.subr.bf16.mxu0 0
        %1487 = vmatpush1.bf16.msra.mxu0 0
        %1488 = vmatprep.subr.bf16.mxu0 0
        %1489 = vmatpush1.bf16.msra.mxu0 0
        %1490 = vmatprep.subr.bf16.mxu0 0
        %1491 = vmatpush1.bf16.msra.mxu0 0
        %1492 = vmatprep.subr.bf16.mxu0 0
        %1493 = vmatpush1.bf16.msra.mxu0 0
        %1494 = vmatprep.subr.bf16.mxu0 0
        %1495 = vmatpush1.bf16.msra.mxu0 0
        %1496 = vmatprep.subr.bf16.mxu0 0
        %1497 = vmatpush1.bf16.msra.mxu0 %v1480
        %1498 = vmatprep.subr.bf16.mxu0 0
        %1499 = vmatpush2.bf16.msra.mxu0 0
        %1500 = vmatprep.subr.bf16.mxu0 0
        %1501 = vmatpush2.bf16.msra.mxu0 0
        %1502 = vmatprep.subr.bf16.mxu0 0
        %1503 = vmatpush2.bf16.msra.mxu0 0
        %1504 = vmatprep.subr.bf16.mxu0 0
        %1505 = vmatpush2.bf16.msra.mxu0 0
        %1506 = vmatprep.subr.bf16.mxu0 0
        %1507 = vmatpush2.bf16.msra.mxu0 0
        %1508 = vmatprep.subr.bf16.mxu0 0
        %1509 = vmatpush2.bf16.msra.mxu0 0
        %1510 = vmatprep.subr.bf16.mxu0 0
        %1511 = vmatpush2.bf16.msra.mxu0 0
        %1512 = vmatprep.subr.bf16.mxu0 0
        %1513 = vmatpush2.bf16.msra.mxu0 0
        %1514 = vmatprep.mubr.bf16.mxu0 0
        %1515 = vmatmul.mubr.bf16.gmra.mxu0 %v1477
        %v1516 = vpop.f32.mrf.mxu0
        %v1517 = vadd.f32 0.0, %v1516
        %v1518 = vpop.f32.mrf.mxu0
        %v1519 = vpop.f32.mrf.mxu0
        %v1520 = vpop.f32.mrf.mxu0
        %1521 = vdwg.mxu0
        %1522 = vrot.lane.b32.xlu0 %v648, 40
        %v1523 = vpop.permute.xlu0 %1522
        %v1525 = vsel %vm652, %v1473, 0
        %v1528 = vsel %vm777, %v1523, 0
        %1530 = vmatprep.subr.bf16.mxu0 0
        %1531 = vmatpush1.bf16.msra.mxu0 0
        %1532 = vmatprep.subr.bf16.mxu0 0
        %1533 = vmatpush1.bf16.msra.mxu0 0
        %1534 = vmatprep.subr.bf16.mxu0 0
        %1535 = vmatpush1.bf16.msra.mxu0 0
        %1536 = vmatprep.subr.bf16.mxu0 0
        %1537 = vmatpush1.bf16.msra.mxu0 0
        %1538 = vmatprep.subr.bf16.mxu0 0
        %1539 = vmatpush1.bf16.msra.mxu0 0
        %1540 = vmatprep.subr.bf16.mxu0 0
        %1541 = vmatpush1.bf16.msra.mxu0 0
        %1542 = vmatprep.subr.bf16.mxu0 0
        %1543 = vmatpush1.bf16.msra.mxu0 0
        %1544 = vmatprep.subr.bf16.mxu0 0
        %1545 = vmatpush1.bf16.msra.mxu0 %v1528
        %1546 = vmatprep.subr.bf16.mxu0 0
        %1547 = vmatpush2.bf16.msra.mxu0 0
        %1548 = vmatprep.subr.bf16.mxu0 0
        %1549 = vmatpush2.bf16.msra.mxu0 0
        %1550 = vmatprep.subr.bf16.mxu0 0
        %1551 = vmatpush2.bf16.msra.mxu0 0
        %1552 = vmatprep.subr.bf16.mxu0 0
        %1553 = vmatpush2.bf16.msra.mxu0 0
        %1554 = vmatprep.subr.bf16.mxu0 0
        %1555 = vmatpush2.bf16.msra.mxu0 0
        %1556 = vmatprep.subr.bf16.mxu0 0
        %1557 = vmatpush2.bf16.msra.mxu0 0
        %1558 = vmatprep.subr.bf16.mxu0 0
        %1559 = vmatpush2.bf16.msra.mxu0 0
        %1560 = vmatprep.subr.bf16.mxu0 0
        %1561 = vmatpush2.bf16.msra.mxu0 0
        %1562 = vmatprep.mubr.bf16.mxu0 0
        %1563 = vmatmul.mubr.bf16.gmra.mxu0 %v1525
        %v1564 = vpop.f32.mrf.mxu0
        %v1565 = vadd.f32 0.0, %v1564
        %v1566 = vpop.f32.mrf.mxu0
        %v1567 = vpop.f32.mrf.mxu0
        %v1568 = vpop.f32.mrf.mxu0
        %1569 = vdwg.mxu0
        %v1570 = vpack.c.bf16 %v1565, %v1517
        %v1572 = vunpack.c.l.b16 %v1570
        %v1573 = vunpack.c.h.b16 %v1570
        %v1574 = vpack.c.b16 %v1572, %v1572
        %v1575 = vpack.c.b16 %v1573, %v1573
        %1576 = vrot.lane.b32.xlu0 %v1574, 24
        %v1577 = vpop.permute.xlu0 %1576
        %1578 = vrot.lane.b32.xlu0 %v1575, 24
        %v1579 = vpop.permute.xlu0 %1578
        %vm1582 = vcmask 257216
        %1583 = vst.msk [vmem:[#allocation3] sm:$0xf] %vm1582, %v1577
        %1584 = vst.msk [vmem:[#allocation3 + $0x4] sm:$0xf] %vm1582, %v1579
        %v1585 = vld [vmem:[#allocation3] sm:$0xf]
        %v1586 = vld [vmem:[#allocation3 + $0x4] sm:$0xf]
        %v1587 = vld [vmem:[%s541] sm:$0xf]
        %v1588 = vld [vmem:[%s541 + $0x4] sm:$0xf]
        %v1589 = vld [vmem:[%s541 + $0x8] sm:$0xf]
        %v1590 = vld [vmem:[%s541 + $0xc] sm:$0xf]
        %v1591 = vld [vmem:[%s544] sm:$0x1]
        %v1593 = vlaneseq
        %v1594 = vshrl.u32 %v1593, 7
        %v1595 = vsub.s32 0, %v1594
        %v1596 = vrot.slane %v1591, %v1595
        %v1600 = vunpack.c.l.b16 %v1585
        %v1601 = vunpack.c.l.b16 %v1586
        %v1602 = vpack.c.b16 %v1601, %v1600
        %v1607 = vunpack.c.l.b16 %v1587
        %v1608 = vunpack.c.l.b16 %v1588
        %v1609 = vunpack.c.l.b16 %v1589
        %v1610 = vunpack.c.l.b16 %v1590
        %v1611 = vpack.c.b16 %v1608, %v1607
        %v1612 = vpack.c.b16 %v1610, %v1609
        %v1616 = vsel %vm602, %v1602, 0
        %1618 = vmatprep.subr.bf16.mxu0 0
        %1619 = vmatpush1.bf16.msra.mxu0 0
        %1620 = vmatprep.subr.bf16.mxu0 0
        %1621 = vmatpush1.bf16.msra.mxu0 0
        %1622 = vmatprep.subr.bf16.mxu0 0
        %1623 = vmatpush1.bf16.msra.mxu0 0
        %1624 = vmatprep.subr.bf16.mxu0 0
        %1625 = vmatpush1.bf16.msra.mxu0 0
        %1626 = vmatprep.subr.bf16.mxu0 0
        %1627 = vmatpush1.bf16.msra.mxu0 0
        %1628 = vmatprep.subr.bf16.mxu0 0
        %1629 = vmatpush1.bf16.msra.mxu0 0
        %1630 = vmatprep.subr.bf16.mxu0 0
        %1631 = vmatpush1.bf16.msra.mxu0 %v1612
        %1632 = vmatprep.subr.bf16.mxu0 0
        %1633 = vmatpush1.bf16.msra.mxu0 %v1611
        %1634 = vmatprep.subr.bf16.mxu0 0
        %1635 = vmatpush2.bf16.msra.mxu0 0
        %1636 = vmatprep.subr.bf16.mxu0 0
        %1637 = vmatpush2.bf16.msra.mxu0 0
        %1638 = vmatprep.subr.bf16.mxu0 0
        %1639 = vmatpush2.bf16.msra.mxu0 0
        %1640 = vmatprep.subr.bf16.mxu0 0
        %1641 = vmatpush2.bf16.msra.mxu0 0
        %1642 = vmatprep.subr.bf16.mxu0 0
        %1643 = vmatpush2.bf16.msra.mxu0 0
        %1644 = vmatprep.subr.bf16.mxu0 0
        %1645 = vmatpush2.bf16.msra.mxu0 0
        %1646 = vmatprep.subr.bf16.mxu0 0
        %1647 = vmatpush2.bf16.msra.mxu0 0
        %1648 = vmatprep.subr.bf16.mxu0 0
        %1649 = vmatpush2.bf16.msra.mxu0 0
        %1650 = vmatprep.mubr.bf16.mxu0 0
        %1651 = vmatmul.mubr.bf16.gmra.mxu0 %v1616
        %v1652 = vpop.f32.mrf.mxu0
        %v1653 = vadd.f32 %v1596, %v1652
        %v1654 = vpop.f32.mrf.mxu0
        %v1655 = vpop.f32.mrf.mxu0
        %v1656 = vadd.f32 %v1596, %v1655
        %v1657 = vpop.f32.mrf.mxu0
        %1658 = vdwg.mxu0
        %v1659 = vadd.f32 %v583, %v1653
        %v1660 = vadd.f32 %v584, %v1656
        %v1661 = vsel %vm602, %v1659, 0.0
        %v1662 = vsel %vm602, %v1660, 0.0
        %v1663 = vadd.f32 %v1661, %v1662
        %v1664 = vrot.slane %v1663, 4
        %v1665 = vadd.f32 %v1663, %v1664
        %v1666 = vrot.slane %v1665, 2
        %v1667 = vadd.f32 %v1665, %v1666
        %v1668 = vrot.slane %v1667, 1
        %v1669 = vadd.f32 %v1667, %v1668
        %v1670 = vmul.f32 %v1669, 0.0625
        %v1671 = vmul.f32 %v1659, %v1659
        %v1672 = vmul.f32 %v1660, %v1660
        %v1673 = vsel %vm602, %v1671, 0.0
        %v1674 = vsel %vm602, %v1672, 0.0
        %v1675 = vadd.f32 %v1673, %v1674
        %v1676 = vrot.slane %v1675, 4
        %v1677 = vadd.f32 %v1675, %v1676
        %v1678 = vrot.slane %v1677, 2
        %v1679 = vadd.f32 %v1677, %v1678
        %v1680 = vrot.slane %v1679, 1
        %v1681 = vadd.f32 %v1679, %v1680
        %v1682 = vmul.f32 %v1681, 0.0625
        %v1683 = vmul.f32 %v1670, %v1670
        %v1684 = vsub.f32 %v1682, %v1683
        %v1685 = vmax.f32 %v1684, 0.0
        %v1686 = vsub.f32 %v1659, %v1670
        %v1687 = vsub.f32 %v1660, %v1670
        %v1688 = vadd.f32 %v1685, 1e-05
        %v1689 = vrsqrt.pop %v1688
        %v1690 = vmul.f32 %v1686, %v1689
        %v1691 = vmul.f32 %v1687, %v1689
        %v1692 = vld [vmem:[%s547] sm:$0x1]
        %v1694 = vlaneseq
        %v1695 = vshrl.u32 %v1694, 7
        %v1696 = vsub.s32 0, %v1695
        %v1697 = vrot.slane %v1692, %v1696
        %v1699 = vmul.f32 %v1690, %v1697
        %v1700 = vmul.f32 %v1691, %v1697
        %v1701 = vld [vmem:[%s550] sm:$0x1]
        %v1703 = vlaneseq
        %v1704 = vshrl.u32 %v1703, 7
        %v1705 = vsub.s32 0, %v1704
        %v1706 = vrot.slane %v1701, %v1705
        %v1708 = vadd.f32 %v1699, %v1706
        %v1709 = vadd.f32 %v1700, %v1706
        %v1710 = vpack.c.bf16 %v1709, %v1708
        %v1711 = vld [vmem:[%s555] sm:$0xf]
        %v1712 = vld [vmem:[%s555 + $0x4] sm:$0xf]
        %v1713 = vld [vmem:[%s555 + $0x8] sm:$0xf]
        %v1714 = vld [vmem:[%s555 + $0xc] sm:$0xf]
        %v1715 = vld [vmem:[%s558] sm:$0x1]
        %v1717 = vlaneseq
        %v1718 = vshrl.u32 %v1717, 7
        %v1719 = vsub.s32 0, %v1718
        %v1720 = vrot.slane %v1715, %v1719
        %v1726 = vunpack.c.l.b16 %v1711
        %v1727 = vunpack.c.l.b16 %v1712
        %v1728 = vunpack.c.l.b16 %v1713
        %v1729 = vunpack.c.l.b16 %v1714
        %v1730 = vpack.c.b16 %v1727, %v1726
        %v1731 = vpack.c.b16 %v1729, %v1728
        %v1735 = vsel %vm602, %v1710, 0
        %1737 = vmatprep.subr.bf16.mxu0 0
        %1738 = vmatpush1.bf16.msra.mxu0 0
        %1739 = vmatprep.subr.bf16.mxu0 0
        %1740 = vmatpush1.bf16.msra.mxu0 0
        %1741 = vmatprep.subr.bf16.mxu0 0
        %1742 = vmatpush1.bf16.msra.mxu0 0
        %1743 = vmatprep.subr.bf16.mxu0 0
        %1744 = vmatpush1.bf16.msra.mxu0 0
        %1745 = vmatprep.subr.bf16.mxu0 0
        %1746 = vmatpush1.bf16.msra.mxu0 0
        %1747 = vmatprep.subr.bf16.mxu0 0
        %1748 = vmatpush1.bf16.msra.mxu0 0
        %1749 = vmatprep.subr.bf16.mxu0 0
        %1750 = vmatpush1.bf16.msra.mxu0 %v1731
        %1751 = vmatprep.subr.bf16.mxu0 0
        %1752 = vmatpush1.bf16.msra.mxu0 %v1730
        %1753 = vmatprep.subr.bf16.mxu0 0
        %1754 = vmatpush2.bf16.msra.mxu0 0
        %1755 = vmatprep.subr.bf16.mxu0 0
        %1756 = vmatpush2.bf16.msra.mxu0 0
        %1757 = vmatprep.subr.bf16.mxu0 0
        %1758 = vmatpush2.bf16.msra.mxu0 0
        %1759 = vmatprep.subr.bf16.mxu0 0
        %1760 = vmatpush2.bf16.msra.mxu0 0
        %1761 = vmatprep.subr.bf16.mxu0 0
        %1762 = vmatpush2.bf16.msra.mxu0 0
        %1763 = vmatprep.subr.bf16.mxu0 0
        %1764 = vmatpush2.bf16.msra.mxu0 0
        %1765 = vmatprep.subr.bf16.mxu0 0
        %1766 = vmatpush2.bf16.msra.mxu0 0
        %1767 = vmatprep.subr.bf16.mxu0 0
        %1768 = vmatpush2.bf16.msra.mxu0 0
        %1769 = vmatprep.mubr.bf16.mxu0 0
        %1770 = vmatmul.mubr.bf16.gmra.mxu0 %v1735
        %v1771 = vpop.f32.mrf.mxu0
        %v1772 = vadd.f32 %v1720, %v1771
        %v1773 = vpop.f32.mrf.mxu0
        %v1774 = vpop.f32.mrf.mxu0
        %v1775 = vadd.f32 %v1720, %v1774
        %v1776 = vpop.f32.mrf.mxu0
        %1777 = vdwg.mxu0
        %v1778 = vmax.f32 %v1772, 0.0
        %v1779 = vmax.f32 %v1775, 0.0
        %v1780 = vpack.c.bf16 %v1779, %v1778
        %v1781 = vld [vmem:[%s563] sm:$0xf]
        %v1782 = vld [vmem:[%s563 + $0x4] sm:$0xf]
        %v1783 = vld [vmem:[%s563 + $0x8] sm:$0xf]
        %v1784 = vld [vmem:[%s563 + $0xc] sm:$0xf]
        %v1785 = vld [vmem:[%s563 + $0x10] sm:$0xf]
        %v1786 = vld [vmem:[%s563 + $0x14] sm:$0xf]
        %v1787 = vld [vmem:[%s563 + $0x18] sm:$0xf]
        %v1788 = vld [vmem:[%s563 + $0x1c] sm:$0xf]
        %v1789 = vld [vmem:[%s566] sm:$0x1]
        %v1791 = vlaneseq
        %v1792 = vshrl.u32 %v1791, 7
        %v1793 = vsub.s32 0, %v1792
        %v1794 = vrot.slane %v1789, %v1793
        %v1804 = vunpack.c.l.b16 %v1781
        %v1805 = vunpack.c.l.b16 %v1782
        %v1806 = vunpack.c.l.b16 %v1783
        %v1807 = vunpack.c.l.b16 %v1784
        %v1808 = vunpack.c.l.b16 %v1785
        %v1809 = vunpack.c.l.b16 %v1786
        %v1810 = vunpack.c.l.b16 %v1787
        %v1811 = vunpack.c.l.b16 %v1788
        %v1812 = vpack.c.b16 %v1805, %v1804
        %v1813 = vpack.c.b16 %v1807, %v1806
        %v1814 = vpack.c.b16 %v1809, %v1808
        %v1815 = vpack.c.b16 %v1811, %v1810
        %vm1820 = vcmask 523264
        %v1822 = vsel %vm1820, %v1780, 0
        %1824 = vmatprep.subr.bf16.mxu0 0
        %1825 = vmatpush1.bf16.msra.mxu0 0
        %1826 = vmatprep.subr.bf16.mxu0 0
        %1827 = vmatpush1.bf16.msra.mxu0 0
        %1828 = vmatprep.subr.bf16.mxu0 0
        %1829 = vmatpush1.bf16.msra.mxu0 0
        %1830 = vmatprep.subr.bf16.mxu0 0
        %1831 = vmatpush1.bf16.msra.mxu0 0
        %1832 = vmatprep.subr.bf16.mxu0 0
        %1833 = vmatpush1.bf16.msra.mxu0 %v1815
        %1834 = vmatprep.subr.bf16.mxu0 0
        %1835 = vmatpush1.bf16.msra.mxu0 %v1814
        %1836 = vmatprep.subr.bf16.mxu0 0
        %1837 = vmatpush1.bf16.msra.mxu0 %v1813
        %1838 = vmatprep.subr.bf16.mxu0 0
        %1839 = vmatpush1.bf16.msra.mxu0 %v1812
        %1840 = vmatprep.subr.bf16.mxu0 0
        %1841 = vmatpush2.bf16.msra.mxu0 0
        %1842 = vmatprep.subr.bf16.mxu0 0
        %1843 = vmatpush2.bf16.msra.mxu0 0
        %1844 = vmatprep.subr.bf16.mxu0 0
        %1845 = vmatpush2.bf16.msra.mxu0 0
        %1846 = vmatprep.subr.bf16.mxu0 0
        %1847 = vmatpush2.bf16.msra.mxu0 0
        %1848 = vmatprep.subr.bf16.mxu0 0
        %1849 = vmatpush2.bf16.msra.mxu0 0
        %1850 = vmatprep.subr.bf16.mxu0 0
        %1851 = vmatpush2.bf16.msra.mxu0 0
        %1852 = vmatprep.subr.bf16.mxu0 0
        %1853 = vmatpush2.bf16.msra.mxu0 0
        %1854 = vmatprep.subr.bf16.mxu0 0
        %1855 = vmatpush2.bf16.msra.mxu0 0
        %1856 = vmatprep.mubr.bf16.mxu0 0
        %1857 = vmatmul.mubr.bf16.gmra.mxu0 %v1822
        %v1858 = vpop.f32.mrf.mxu0
        %v1859 = vadd.f32 %v1794, %v1858
        %v1860 = vpop.f32.mrf.mxu0
        %v1861 = vpop.f32.mrf.mxu0
        %v1862 = vadd.f32 %v1794, %v1861
        %v1863 = vpop.f32.mrf.mxu0
        %1864 = vdwg.mxu0
        %v1865 = vadd.f32 %v1708, %v1859
        %v1866 = vadd.f32 %v1709, %v1862
        %v1867 = vsel %vm602, %v1865, 0.0
        %v1868 = vsel %vm602, %v1866, 0.0
        %v1869 = vadd.f32 %v1867, %v1868
        %v1870 = vrot.slane %v1869, 4
        %v1871 = vadd.f32 %v1869, %v1870
        %v1872 = vrot.slane %v1871, 2
        %v1873 = vadd.f32 %v1871, %v1872
        %v1874 = vrot.slane %v1873, 1
        %v1875 = vadd.f32 %v1873, %v1874
        %v1876 = vmul.f32 %v1875, 0.0625
        %v1877 = vmul.f32 %v1865, %v1865
        %v1878 = vmul.f32 %v1866, %v1866
        %v1879 = vsel %vm602, %v1877, 0.0
        %v1880 = vsel %vm602, %v1878, 0.0
        %v1881 = vadd.f32 %v1879, %v1880
        %v1882 = vrot.slane %v1881, 4
        %v1883 = vadd.f32 %v1881, %v1882
        %v1884 = vrot.slane %v1883, 2
        %v1885 = vadd.f32 %v1883, %v1884
        %v1886 = vrot.slane %v1885, 1
        %v1887 = vadd.f32 %v1885, %v1886
        %v1888 = vmul.f32 %v1887, 0.0625
        %v1889 = vmul.f32 %v1876, %v1876
        %v1890 = vsub.f32 %v1888, %v1889
        %v1891 = vmax.f32 %v1890, 0.0
        %v1892 = vsub.f32 %v1865, %v1876
        %v1893 = vsub.f32 %v1866, %v1876
        %v1894 = vadd.f32 %v1891, 1e-05
        %v1895 = vrsqrt.pop %v1894
        %v1896 = vmul.f32 %v1892, %v1895
        %v1897 = vmul.f32 %v1893, %v1895
        %v1898 = vld [vmem:[%s569] sm:$0x1]
        %v1900 = vlaneseq
        %v1901 = vshrl.u32 %v1900, 7
        %v1902 = vsub.s32 0, %v1901
        %v1903 = vrot.slane %v1898, %v1902
        %v1905 = vmul.f32 %v1896, %v1903
        %v1906 = vmul.f32 %v1897, %v1903
        %v1907 = vld [vmem:[%s572] sm:$0x1]
        %v1909 = vlaneseq
        %v1910 = vshrl.u32 %v1909, 7
        %v1911 = vsub.s32 0, %v1910
        %v1912 = vrot.slane %v1907, %v1911
        %v1914 = vadd.f32 %v1905, %v1912
        %v1915 = vadd.f32 %v1906, %v1912
        %1916 = vst.msk [vmem:[#allocation2] sm:$0xff] %vm602, %v1914
        %1917 = vst.msk [vmem:[#allocation2 + $0x8] sm:$0xff] %vm602, %v1915
        %p1918 = scmp.eq.s32.totalorder %s25, 1
        // Predicated region
        $region77: #{tpu_custom_call.1} parent=67 // pred_check
          %p1919 = pneg %p1918
        $region78: #{tpu_custom_call.1} parent=67 // pred_check_branch
          %1921 = sbr.rel (%p1919) target = $region80
        $region79: #{tpu_custom_call.1} parent=67 // pred_region
          %1922 = vst.msk [vmem:[#allocation7] sm:$0xff] %vm602, %v1914
          %1923 = vst.msk [vmem:[#allocation7 + $0x8] sm:$0xff] %vm602, %v1915
        $region80: #{tpu_custom_call.1} parent=67 // pred_fallthru
          _
        // Predicated region
        $region81: #{tpu_custom_call.1} parent=67 // pred_check
          %p1924 = pneg %p345
        $region82: #{tpu_custom_call.1} parent=67 // pred_check_branch
          %1926 = sbr.rel (%p1924) target = $region84
        $region83: #{tpu_custom_call.1} parent=67 // pred_region
          %s1928 = ssub.s32 256, 256
          %1929 = vsyncadd [#allocation6], %s1928
          %s1930 = sshll.u32 [#allocation7], 4
          %s1931 = int_to_ptr.vmem [resolvable:$true] %s1930
          %1936 = dma.vmem_to_hbm [thread:$0]  %s1931, 256, %s12, [#allocation6], 128, 128, 8
        $region84: #{tpu_custom_call.1} parent=67 // pred_fallthru
          _
        // Predicated region
        $region85: #{tpu_custom_call.1} parent=67 // pred_check
          %p1937 = pneg %p345
        $region86: #{tpu_custom_call.1} parent=67 // pred_check_branch
          %1939 = sbr.rel (%p1937) target = $region88
        $region87: #{tpu_custom_call.1} parent=67 // pred_region
          %1940 = dma.done [#allocation6], 256
        $region88: #{tpu_custom_call.1} parent=67 // pred_fallthru
          _
      $region68: #{tpu_custom_call.1} parent=5 // pred_fallthru
        _
      %p1941 = scmp.le.s32.totalorder 2, %s20
      // Predicated region
      $region89: #{tpu_custom_call.1} parent=5 // pred_check
        %p1942 = pneg %p1941
      $region90: #{tpu_custom_call.1} parent=5 // pred_check_branch
        %1944 = sbr.rel (%p1942) target = $region92
      $region91: #{tpu_custom_call.1} parent=5 // pred_region
        %s1945 = ssub.s32 %s20, 2
      $region92: #{tpu_custom_call.1} parent=5 // pred_fallthru
        _
    $region6: #{tpu_custom_call.1} parent=1 // loop_footer
      %s24 = sadd.s32 1, %s20
    $region7: #{tpu_custom_call.1} parent=1 // loop_footer_branch
      %19 = sbr.rel target = $region3
    $region8: #{tpu_custom_call.1} parent=1 // loop_exit
      _
    %1946 = vsyncpa [#allocation5], 1
    %s1947 = scalar_lea.sflag [#allocation5], 1
    %1948 = vsyncpa %s1947, 1
    %1949 = vsyncpa [#allocation6], 1
    %s1950 = scalar_lea.sflag [#allocation6], 1
    %1951 = vsyncpa %s1950, 1

</llo_original>
